<compile_context>
chip_gen: v7x
topology: tpu7x:2x2x1
jax: 0.10.0
libtpu: 0.0.40
codegen_flags: <defaults>
</compile_context>

<pallas_src>
import functools

import numpy as np
import jax
import jax.numpy as jnp
from jax.experimental import pallas as pl
from jax.experimental.pallas import tpu as pltpu


# ----------------------------------------------------------------------------
# Host/XLA-side precomputation: conv -> shift / banded matrices
# ----------------------------------------------------------------------------
def _conv_as_matmuls(conv_w, h, w):
    """Re-express the zero-padded KxK 2-channel conv as matmul operands.

    conv_w: (2, K, K) -- input-channel 0 multiplies the avg map, 1 the max map.
    Returns:
      R: (K, h, h)    R[ki] is a shifted identity selecting rows i+ki-pad.
      B: (2, K, w, w) B[c, ki] is a banded matrix holding taps conv_w[c, ki, :].
    such that   conv(cat([avg, mx])) == sum_ki R[ki] @ (avg @ B[0,ki] + mx @ B[1,ki])
    """
    cw = conv_w.astype(jnp.float32)
    K = cw.shape[-1]
    pad = K // 2

    ks = jnp.arange(K)[:, None, None]
    ii = jnp.arange(h)[None, :, None]
    pp = jnp.arange(h)[None, None, :]
    R = (pp == ii + ks - pad).astype(jnp.float32)                  # (K, h, h)

    qq = jnp.arange(w)[:, None]
    jj = jnp.arange(w)[None, :]
    kj = qq - jj + pad                                             # (w, w)
    valid = (kj >= 0) & (kj < K)
    kj_c = jnp.clip(kj, 0, K - 1)
    B = jnp.where(valid[None, None, :, :], cw[:, :, kj_c], 0.0)    # (2, K, w, w)
    return R, B


# ----------------------------------------------------------------------------
# Fused Pallas kernel: channel pooling + KxK conv + sigmoid (per batch element)
# ----------------------------------------------------------------------------
def _spatial_attention_kernel(x_ref, r_ref, b_ref, o_ref, *, ksize):
    x = x_ref[0]                                    # (c, h, w) f32
    avg = jnp.mean(x, axis=0)                       # (h, w)  channel mean
    mx = jnp.max(x, axis=0)                         # (h, w)  channel max
    acc = jnp.zeros_like(avg)
    for ki in range(ksize):                         # unrolled at trace time
        col = (jnp.dot(avg, b_ref[0, ki], preferred_element_type=jnp.float32)
               + jnp.dot(mx, b_ref[1, ki], preferred_element_type=jnp.float32))
        acc = acc + jnp.dot(r_ref[ki], col, preferred_element_type=jnp.float32)
    o_ref[0, 0] = jax.nn.sigmoid(acc)


def spatial_attention(x, conv_w, *, kernel_size=7):
    """CBAM SpatialAttention forward.  x:(b,c,h,w), conv_w:(1,2,K,K) -> (b,1,h,w)."""
    assert kernel_size in (3, 7), "kernel size must be 3 or 7"
    b, c, h, w = x.shape
    x = x.astype(jnp.float32)
    R, B = _conv_as_matmuls(jnp.asarray(conv_w)[0], h, w)

    kern = functools.partial(_spatial_attention_kernel, ksize=kernel_size)
    return pl.pallas_call(
        kern,
        grid=(b,),
        in_specs=[
            pl.BlockSpec((1, c, h, w), lambda i: (i, 0, 0, 0)),
            pl.BlockSpec((kernel_size, h, h), lambda i: (0, 0, 0)),
            pl.BlockSpec((2, kernel_size, w, w), lambda i: (0, 0, 0, 0)),
        ],
        out_specs=pl.BlockSpec((1, 1, h, w), lambda i: (i, 0, 0, 0)),
        out_shape=jax.ShapeDtypeStruct((b, 1, h, w), jnp.float32),
        compiler_params=pltpu.CompilerParams(dimension_semantics=("parallel",)),
    )(x, R, B)


# ----------------------------------------------------------------------------
# Pure-JAX reference (mirrors the PyTorch forward) for correctness checking
# ----------------------------------------------------------------------------
def spatial_attention_ref(x, conv_w, *, kernel_size=7):
    pad = kernel_size // 2
    avg = jnp.mean(x, axis=1, keepdims=True)
    mx = jnp.max(x, axis=1, keepdims=True)
    pooled = jnp.concatenate([avg, mx], axis=1)
    y = jax.lax.conv_general_dilated(
        pooled.astype(jnp.float32), jnp.asarray(conv_w, jnp.float32),
        window_strides=(1, 1), padding=[(pad, pad), (pad, pad)],
        dimension_numbers=("NCHW", "OIHW", "NCHW"),
        precision=jax.lax.Precision.HIGHEST)
    return jax.nn.sigmoid(y)


# ----------------------------------------------------------------------------
if __name__ == "__main__":
    B_, C_, H_, W_ = 2, 64, 16, 16
    K_ = 7

    key = jax.random.PRNGKey(0)
    k1, k2 = jax.random.split(key)
    x = jax.random.normal(k1, (B_, C_, H_, W_), jnp.float32)
    conv_w = 0.1 * jax.random.normal(k2, (1, 2, K_, K_), jnp.float32)  # Conv2d(2,1,7) weight

    fwd = jax.jit(functools.partial(spatial_attention, kernel_size=K_))
    out = fwd(x, conv_w)
    jax.block_until_ready(out)

    ref = spatial_attention_ref(x, conv_w, kernel_size=K_)
    assert out.shape == (B_, 1, H_, W_)
    assert bool(jnp.all(jnp.isfinite(out)))
    np.testing.assert_allclose(np.asarray(out), np.asarray(ref), rtol=5e-3, atol=5e-3)
    print("KERNEL_OK")
</pallas_src>

<mosaic_0001>
module attributes {stable_mosaic.version = 11 : i64} {
  func.func @_spatial_attention_kernel(%arg0: i32, %arg1: memref<1x64x16x16xf32, #tpu.memory_space<vmem>>, %arg2: memref<7x16x16xf32, #tpu.memory_space<vmem>>, %arg3: memref<2x7x16x16xf32, #tpu.memory_space<vmem>>, %arg4: memref<1x1x16x16xf32, #tpu.memory_space<vmem>>) attributes {dimension_semantics = [#tpu.dimension_semantics<parallel>], iteration_bounds = array<i64: 2>, scalar_prefetch = 0 : i64, scratch_operands = 0 : i64, tpu.core_type = #tpu.core_type<tc>, window_params = [{transform_indices = @transform_0, window_bounds = array<i64: 1, 64, 16, 16>}, {pipeline_mode = #tpu.pipeline_mode<synchronous>, transform_indices = @transform_1, window_bounds = array<i64: 7, 16, 16>}, {pipeline_mode = #tpu.pipeline_mode<synchronous>, transform_indices = @transform_2, window_bounds = array<i64: 2, 7, 16, 16>}, {transform_indices = @transform_3, window_bounds = array<i64: 1, 1, 16, 16>}]} {
    %c0 = arith.constant 0 : index
    %c0_0 = arith.constant 0 : index
    %c0_1 = arith.constant 0 : index
    %c0_2 = arith.constant 0 : index
    %0 = vector.load %arg1[%c0, %c0_0, %c0_1, %c0_2] : memref<1x64x16x16xf32, #tpu.memory_space<vmem>>, vector<1x64x16x16xf32>
    %1 = vector.shape_cast %0 : vector<1x64x16x16xf32> to vector<64x16x16xf32>
    %cst = arith.constant dense<0.000000e+00> : vector<16x16xf32>
    %2 = vector.multi_reduction <add>, %1, %cst [0] : vector<64x16x16xf32> to vector<16x16xf32>
    %cst_3 = arith.constant 6.400000e+01 : f32
    %3 = vector.broadcast %cst_3 : f32 to vector<16x16xf32>
    %4 = arith.divf %2, %3 : vector<16x16xf32>
    %cst_4 = arith.constant dense<0xFF800000> : vector<16x16xf32>
    %5 = vector.multi_reduction <maximumf>, %1, %cst_4 [0] : vector<64x16x16xf32> to vector<16x16xf32>
    %cst_5 = arith.constant 0.000000e+00 : f32
    %6 = vector.broadcast %cst_5 : f32 to vector<16x16xf32>
    %c0_6 = arith.constant 0 : index
    %c0_7 = arith.constant 0 : index
    %c0_8 = arith.constant 0 : index
    %c0_9 = arith.constant 0 : index
    %7 = vector.load %arg3[%c0_6, %c0_7, %c0_8, %c0_9] : memref<2x7x16x16xf32, #tpu.memory_space<vmem>>, vector<1x1x16x16xf32>
    %8 = vector.shape_cast %7 : vector<1x1x16x16xf32> to vector<16x16xf32>
    %cst_10 = arith.constant dense<0.000000e+00> : vector<16x16xf32>
    %9 = tpu.matmul %4, %8, %cst_10 {dimension_numbers = #tpu.dot_dimension_numbers<[1], [0], [0], [1], [0, 0, 1, 1], [], []>} : vector<16x16xf32>, vector<16x16xf32>, vector<16x16xf32> -> vector<16x16xf32>
    %c1 = arith.constant 1 : index
    %c0_11 = arith.constant 0 : index
    %c0_12 = arith.constant 0 : index
    %c0_13 = arith.constant 0 : index
    %10 = vector.load %arg3[%c1, %c0_11, %c0_12, %c0_13] : memref<2x7x16x16xf32, #tpu.memory_space<vmem>>, vector<1x1x16x16xf32>
    %11 = vector.shape_cast %10 : vector<1x1x16x16xf32> to vector<16x16xf32>
    %cst_14 = arith.constant dense<0.000000e+00> : vector<16x16xf32>
    %12 = tpu.matmul %5, %11, %cst_14 {dimension_numbers = #tpu.dot_dimension_numbers<[1], [0], [0], [1], [0, 0, 1, 1], [], []>} : vector<16x16xf32>, vector<16x16xf32>, vector<16x16xf32> -> vector<16x16xf32>
    %13 = arith.addf %9, %12 : vector<16x16xf32>
    %c0_15 = arith.constant 0 : index
    %c0_16 = arith.constant 0 : index
    %c0_17 = arith.constant 0 : index
    %14 = vector.load %arg2[%c0_15, %c0_16, %c0_17] : memref<7x16x16xf32, #tpu.memory_space<vmem>>, vector<1x16x16xf32>
    %15 = vector.shape_cast %14 : vector<1x16x16xf32> to vector<16x16xf32>
    %cst_18 = arith.constant dense<0.000000e+00> : vector<16x16xf32>
    %16 = tpu.matmul %15, %13, %cst_18 {dimension_numbers = #tpu.dot_dimension_numbers<[1], [0], [0], [1], [0, 0, 1, 1], [], []>} : vector<16x16xf32>, vector<16x16xf32>, vector<16x16xf32> -> vector<16x16xf32>
    %17 = arith.addf %6, %16 : vector<16x16xf32>
    %c0_19 = arith.constant 0 : index
    %c1_20 = arith.constant 1 : index
    %c0_21 = arith.constant 0 : index
    %c0_22 = arith.constant 0 : index
    %18 = vector.load %arg3[%c0_19, %c1_20, %c0_21, %c0_22] : memref<2x7x16x16xf32, #tpu.memory_space<vmem>>, vector<1x1x16x16xf32>
    %19 = vector.shape_cast %18 : vector<1x1x16x16xf32> to vector<16x16xf32>
    %cst_23 = arith.constant dense<0.000000e+00> : vector<16x16xf32>
    %20 = tpu.matmul %4, %19, %cst_23 {dimension_numbers = #tpu.dot_dimension_numbers<[1], [0], [0], [1], [0, 0, 1, 1], [], []>} : vector<16x16xf32>, vector<16x16xf32>, vector<16x16xf32> -> vector<16x16xf32>
    %c1_24 = arith.constant 1 : index
    %c1_25 = arith.constant 1 : index
    %c0_26 = arith.constant 0 : index
    %c0_27 = arith.constant 0 : index
    %21 = vector.load %arg3[%c1_24, %c1_25, %c0_26, %c0_27] : memref<2x7x16x16xf32, #tpu.memory_space<vmem>>, vector<1x1x16x16xf32>
    %22 = vector.shape_cast %21 : vector<1x1x16x16xf32> to vector<16x16xf32>
    %cst_28 = arith.constant dense<0.000000e+00> : vector<16x16xf32>
    %23 = tpu.matmul %5, %22, %cst_28 {dimension_numbers = #tpu.dot_dimension_numbers<[1], [0], [0], [1], [0, 0, 1, 1], [], []>} : vector<16x16xf32>, vector<16x16xf32>, vector<16x16xf32> -> vector<16x16xf32>
    %24 = arith.addf %20, %23 : vector<16x16xf32>
    %c1_29 = arith.constant 1 : index
    %c0_30 = arith.constant 0 : index
    %c0_31 = arith.constant 0 : index
    %25 = vector.load %arg2[%c1_29, %c0_30, %c0_31] : memref<7x16x16xf32, #tpu.memory_space<vmem>>, vector<1x16x16xf32>
    %26 = vector.shape_cast %25 : vector<1x16x16xf32> to vector<16x16xf32>
    %cst_32 = arith.constant dense<0.000000e+00> : vector<16x16xf32>
    %27 = tpu.matmul %26, %24, %cst_32 {dimension_numbers = #tpu.dot_dimension_numbers<[1], [0], [0], [1], [0, 0, 1, 1], [], []>} : vector<16x16xf32>, vector<16x16xf32>, vector<16x16xf32> -> vector<16x16xf32>
    %28 = arith.addf %17, %27 : vector<16x16xf32>
    %c0_33 = arith.constant 0 : index
    %c2 = arith.constant 2 : index
    %c0_34 = arith.constant 0 : index
    %c0_35 = arith.constant 0 : index
    %29 = vector.load %arg3[%c0_33, %c2, %c0_34, %c0_35] : memref<2x7x16x16xf32, #tpu.memory_space<vmem>>, vector<1x1x16x16xf32>
    %30 = vector.shape_cast %29 : vector<1x1x16x16xf32> to vector<16x16xf32>
    %cst_36 = arith.constant dense<0.000000e+00> : vector<16x16xf32>
    %31 = tpu.matmul %4, %30, %cst_36 {dimension_numbers = #tpu.dot_dimension_numbers<[1], [0], [0], [1], [0, 0, 1, 1], [], []>} : vector<16x16xf32>, vector<16x16xf32>, vector<16x16xf32> -> vector<16x16xf32>
    %c1_37 = arith.constant 1 : index
    %c2_38 = arith.constant 2 : index
    %c0_39 = arith.constant 0 : index
    %c0_40 = arith.constant 0 : index
    %32 = vector.load %arg3[%c1_37, %c2_38, %c0_39, %c0_40] : memref<2x7x16x16xf32, #tpu.memory_space<vmem>>, vector<1x1x16x16xf32>
    %33 = vector.shape_cast %32 : vector<1x1x16x16xf32> to vector<16x16xf32>
    %cst_41 = arith.constant dense<0.000000e+00> : vector<16x16xf32>
    %34 = tpu.matmul %5, %33, %cst_41 {dimension_numbers = #tpu.dot_dimension_numbers<[1], [0], [0], [1], [0, 0, 1, 1], [], []>} : vector<16x16xf32>, vector<16x16xf32>, vector<16x16xf32> -> vector<16x16xf32>
    %35 = arith.addf %31, %34 : vector<16x16xf32>
    %c2_42 = arith.constant 2 : index
    %c0_43 = arith.constant 0 : index
    %c0_44 = arith.constant 0 : index
    %36 = vector.load %arg2[%c2_42, %c0_43, %c0_44] : memref<7x16x16xf32, #tpu.memory_space<vmem>>, vector<1x16x16xf32>
    %37 = vector.shape_cast %36 : vector<1x16x16xf32> to vector<16x16xf32>
    %cst_45 = arith.constant dense<0.000000e+00> : vector<16x16xf32>
    %38 = tpu.matmul %37, %35, %cst_45 {dimension_numbers = #tpu.dot_dimension_numbers<[1], [0], [0], [1], [0, 0, 1, 1], [], []>} : vector<16x16xf32>, vector<16x16xf32>, vector<16x16xf32> -> vector<16x16xf32>
    %39 = arith.addf %28, %38 : vector<16x16xf32>
    %c0_46 = arith.constant 0 : index
    %c3 = arith.constant 3 : index
    %c0_47 = arith.constant 0 : index
    %c0_48 = arith.constant 0 : index
    %40 = vector.load %arg3[%c0_46, %c3, %c0_47, %c0_48] : memref<2x7x16x16xf32, #tpu.memory_space<vmem>>, vector<1x1x16x16xf32>
    %41 = vector.shape_cast %40 : vector<1x1x16x16xf32> to vector<16x16xf32>
    %cst_49 = arith.constant dense<0.000000e+00> : vector<16x16xf32>
    %42 = tpu.matmul %4, %41, %cst_49 {dimension_numbers = #tpu.dot_dimension_numbers<[1], [0], [0], [1], [0, 0, 1, 1], [], []>} : vector<16x16xf32>, vector<16x16xf32>, vector<16x16xf32> -> vector<16x16xf32>
    %c1_50 = arith.constant 1 : index
    %c3_51 = arith.constant 3 : index
    %c0_52 = arith.constant 0 : index
    %c0_53 = arith.constant 0 : index
    %43 = vector.load %arg3[%c1_50, %c3_51, %c0_52, %c0_53] : memref<2x7x16x16xf32, #tpu.memory_space<vmem>>, vector<1x1x16x16xf32>
    %44 = vector.shape_cast %43 : vector<1x1x16x16xf32> to vector<16x16xf32>
    %cst_54 = arith.constant dense<0.000000e+00> : vector<16x16xf32>
    %45 = tpu.matmul %5, %44, %cst_54 {dimension_numbers = #tpu.dot_dimension_numbers<[1], [0], [0], [1], [0, 0, 1, 1], [], []>} : vector<16x16xf32>, vector<16x16xf32>, vector<16x16xf32> -> vector<16x16xf32>
    %46 = arith.addf %42, %45 : vector<16x16xf32>
    %c3_55 = arith.constant 3 : index
    %c0_56 = arith.constant 0 : index
    %c0_57 = arith.constant 0 : index
    %47 = vector.load %arg2[%c3_55, %c0_56, %c0_57] : memref<7x16x16xf32, #tpu.memory_space<vmem>>, vector<1x16x16xf32>
    %48 = vector.shape_cast %47 : vector<1x16x16xf32> to vector<16x16xf32>
    %cst_58 = arith.constant dense<0.000000e+00> : vector<16x16xf32>
    %49 = tpu.matmul %48, %46, %cst_58 {dimension_numbers = #tpu.dot_dimension_numbers<[1], [0], [0], [1], [0, 0, 1, 1], [], []>} : vector<16x16xf32>, vector<16x16xf32>, vector<16x16xf32> -> vector<16x16xf32>
    %50 = arith.addf %39, %49 : vector<16x16xf32>
    %c0_59 = arith.constant 0 : index
    %c4 = arith.constant 4 : index
    %c0_60 = arith.constant 0 : index
    %c0_61 = arith.constant 0 : index
    %51 = vector.load %arg3[%c0_59, %c4, %c0_60, %c0_61] : memref<2x7x16x16xf32, #tpu.memory_space<vmem>>, vector<1x1x16x16xf32>
    %52 = vector.shape_cast %51 : vector<1x1x16x16xf32> to vector<16x16xf32>
    %cst_62 = arith.constant dense<0.000000e+00> : vector<16x16xf32>
    %53 = tpu.matmul %4, %52, %cst_62 {dimension_numbers = #tpu.dot_dimension_numbers<[1], [0], [0], [1], [0, 0, 1, 1], [], []>} : vector<16x16xf32>, vector<16x16xf32>, vector<16x16xf32> -> vector<16x16xf32>
    %c1_63 = arith.constant 1 : index
    %c4_64 = arith.constant 4 : index
    %c0_65 = arith.constant 0 : index
    %c0_66 = arith.constant 0 : index
    %54 = vector.load %arg3[%c1_63, %c4_64, %c0_65, %c0_66] : memref<2x7x16x16xf32, #tpu.memory_space<vmem>>, vector<1x1x16x16xf32>
    %55 = vector.shape_cast %54 : vector<1x1x16x16xf32> to vector<16x16xf32>
    %cst_67 = arith.constant dense<0.000000e+00> : vector<16x16xf32>
    %56 = tpu.matmul %5, %55, %cst_67 {dimension_numbers = #tpu.dot_dimension_numbers<[1], [0], [0], [1], [0, 0, 1, 1], [], []>} : vector<16x16xf32>, vector<16x16xf32>, vector<16x16xf32> -> vector<16x16xf32>
    %57 = arith.addf %53, %56 : vector<16x16xf32>
    %c4_68 = arith.constant 4 : index
    %c0_69 = arith.constant 0 : index
    %c0_70 = arith.constant 0 : index
    %58 = vector.load %arg2[%c4_68, %c0_69, %c0_70] : memref<7x16x16xf32, #tpu.memory_space<vmem>>, vector<1x16x16xf32>
    %59 = vector.shape_cast %58 : vector<1x16x16xf32> to vector<16x16xf32>
    %cst_71 = arith.constant dense<0.000000e+00> : vector<16x16xf32>
    %60 = tpu.matmul %59, %57, %cst_71 {dimension_numbers = #tpu.dot_dimension_numbers<[1], [0], [0], [1], [0, 0, 1, 1], [], []>} : vector<16x16xf32>, vector<16x16xf32>, vector<16x16xf32> -> vector<16x16xf32>
    %61 = arith.addf %50, %60 : vector<16x16xf32>
    %c0_72 = arith.constant 0 : index
    %c5 = arith.constant 5 : index
    %c0_73 = arith.constant 0 : index
    %c0_74 = arith.constant 0 : index
    %62 = vector.load %arg3[%c0_72, %c5, %c0_73, %c0_74] : memref<2x7x16x16xf32, #tpu.memory_space<vmem>>, vector<1x1x16x16xf32>
    %63 = vector.shape_cast %62 : vector<1x1x16x16xf32> to vector<16x16xf32>
    %cst_75 = arith.constant dense<0.000000e+00> : vector<16x16xf32>
    %64 = tpu.matmul %4, %63, %cst_75 {dimension_numbers = #tpu.dot_dimension_numbers<[1], [0], [0], [1], [0, 0, 1, 1], [], []>} : vector<16x16xf32>, vector<16x16xf32>, vector<16x16xf32> -> vector<16x16xf32>
    %c1_76 = arith.constant 1 : index
    %c5_77 = arith.constant 5 : index
    %c0_78 = arith.constant 0 : index
    %c0_79 = arith.constant 0 : index
    %65 = vector.load %arg3[%c1_76, %c5_77, %c0_78, %c0_79] : memref<2x7x16x16xf32, #tpu.memory_space<vmem>>, vector<1x1x16x16xf32>
    %66 = vector.shape_cast %65 : vector<1x1x16x16xf32> to vector<16x16xf32>
    %cst_80 = arith.constant dense<0.000000e+00> : vector<16x16xf32>
    %67 = tpu.matmul %5, %66, %cst_80 {dimension_numbers = #tpu.dot_dimension_numbers<[1], [0], [0], [1], [0, 0, 1, 1], [], []>} : vector<16x16xf32>, vector<16x16xf32>, vector<16x16xf32> -> vector<16x16xf32>
    %68 = arith.addf %64, %67 : vector<16x16xf32>
    %c5_81 = arith.constant 5 : index
    %c0_82 = arith.constant 0 : index
    %c0_83 = arith.constant 0 : index
    %69 = vector.load %arg2[%c5_81, %c0_82, %c0_83] : memref<7x16x16xf32, #tpu.memory_space<vmem>>, vector<1x16x16xf32>
    %70 = vector.shape_cast %69 : vector<1x16x16xf32> to vector<16x16xf32>
    %cst_84 = arith.constant dense<0.000000e+00> : vector<16x16xf32>
    %71 = tpu.matmul %70, %68, %cst_84 {dimension_numbers = #tpu.dot_dimension_numbers<[1], [0], [0], [1], [0, 0, 1, 1], [], []>} : vector<16x16xf32>, vector<16x16xf32>, vector<16x16xf32> -> vector<16x16xf32>
    %72 = arith.addf %61, %71 : vector<16x16xf32>
    %c0_85 = arith.constant 0 : index
    %c6 = arith.constant 6 : index
    %c0_86 = arith.constant 0 : index
    %c0_87 = arith.constant 0 : index
    %73 = vector.load %arg3[%c0_85, %c6, %c0_86, %c0_87] : memref<2x7x16x16xf32, #tpu.memory_space<vmem>>, vector<1x1x16x16xf32>
    %74 = vector.shape_cast %73 : vector<1x1x16x16xf32> to vector<16x16xf32>
    %cst_88 = arith.constant dense<0.000000e+00> : vector<16x16xf32>
    %75 = tpu.matmul %4, %74, %cst_88 {dimension_numbers = #tpu.dot_dimension_numbers<[1], [0], [0], [1], [0, 0, 1, 1], [], []>} : vector<16x16xf32>, vector<16x16xf32>, vector<16x16xf32> -> vector<16x16xf32>
    %c1_89 = arith.constant 1 : index
    %c6_90 = arith.constant 6 : index
    %c0_91 = arith.constant 0 : index
    %c0_92 = arith.constant 0 : index
    %76 = vector.load %arg3[%c1_89, %c6_90, %c0_91, %c0_92] : memref<2x7x16x16xf32, #tpu.memory_space<vmem>>, vector<1x1x16x16xf32>
    %77 = vector.shape_cast %76 : vector<1x1x16x16xf32> to vector<16x16xf32>
    %cst_93 = arith.constant dense<0.000000e+00> : vector<16x16xf32>
    %78 = tpu.matmul %5, %77, %cst_93 {dimension_numbers = #tpu.dot_dimension_numbers<[1], [0], [0], [1], [0, 0, 1, 1], [], []>} : vector<16x16xf32>, vector<16x16xf32>, vector<16x16xf32> -> vector<16x16xf32>
    %79 = arith.addf %75, %78 : vector<16x16xf32>
    %c6_94 = arith.constant 6 : index
    %c0_95 = arith.constant 0 : index
    %c0_96 = arith.constant 0 : index
    %80 = vector.load %arg2[%c6_94, %c0_95, %c0_96] : memref<7x16x16xf32, #tpu.memory_space<vmem>>, vector<1x16x16xf32>
    %81 = vector.shape_cast %80 : vector<1x16x16xf32> to vector<16x16xf32>
    %cst_97 = arith.constant dense<0.000000e+00> : vector<16x16xf32>
    %82 = tpu.matmul %81, %79, %cst_97 {dimension_numbers = #tpu.dot_dimension_numbers<[1], [0], [0], [1], [0, 0, 1, 1], [], []>} : vector<16x16xf32>, vector<16x16xf32>, vector<16x16xf32> -> vector<16x16xf32>
    %83 = arith.addf %72, %82 : vector<16x16xf32>
    %84 = arith.negf %83 : vector<16x16xf32>
    %85 = math.exp %84 : vector<16x16xf32>
    %cst_98 = arith.constant 1.000000e+00 : f32
    %86 = vector.broadcast %cst_98 : f32 to vector<16x16xf32>
    %87 = arith.addf %86, %85 : vector<16x16xf32>
    %88 = arith.divf %86, %87 : vector<16x16xf32>
    %c0_99 = arith.constant 0 : index
    %c0_100 = arith.constant 0 : index
    %c0_101 = arith.constant 0 : index
    %c0_102 = arith.constant 0 : index
    %89 = vector.load %arg4[%c0_99, %c0_100, %c0_101, %c0_102] : memref<1x1x16x16xf32, #tpu.memory_space<vmem>>, vector<1x1x16x16xf32>
    %90 = vector.shape_cast %89 : vector<1x1x16x16xf32> to vector<16x16xf32>
    %91 = vector.shape_cast %88 : vector<16x16xf32> to vector<1x1x16x16xf32>
    tpu.vector_store %arg4[%c0_99, %c0_100, %c0_101, %c0_102], %91 {strides = array<i32>} : memref<1x1x16x16xf32, #tpu.memory_space<vmem>>, vector<1x1x16x16xf32>,
    return
  }
  func.func @transform_0(%arg0: i32) -> (i32, i32, i32, i32) {
    %c0_i32 = arith.constant 0 : i32
    %c0_i32_0 = arith.constant 0 : i32
    %c0_i32_1 = arith.constant 0 : i32
    %c0_i32_2 = arith.constant 0 : i32
    return %arg0, %c0_i32, %c0_i32_0, %c0_i32_1 : i32, i32, i32, i32
  }
  func.func @transform_1(%arg0: i32) -> (i32, i32, i32) {
    %c0_i32 = arith.constant 0 : i32
    %c0_i32_0 = arith.constant 0 : i32
    %c0_i32_1 = arith.constant 0 : i32
    %c0_i32_2 = arith.constant 0 : i32
    return %c0_i32, %c0_i32_0, %c0_i32_1 : i32, i32, i32
  }
  func.func @transform_2(%arg0: i32) -> (i32, i32, i32, i32) {
    %c0_i32 = arith.constant 0 : i32
    %c0_i32_0 = arith.constant 0 : i32
    %c0_i32_1 = arith.constant 0 : i32
    %c0_i32_2 = arith.constant 0 : i32
    %c0_i32_3 = arith.constant 0 : i32
    return %c0_i32, %c0_i32_0, %c0_i32_1, %c0_i32_2 : i32, i32, i32, i32
  }
  func.func @transform_3(%arg0: i32) -> (i32, i32, i32, i32) {
    %c0_i32 = arith.constant 0 : i32
    %c0_i32_0 = arith.constant 0 : i32
    %c0_i32_1 = arith.constant 0 : i32
    %c0_i32_2 = arith.constant 0 : i32
    return %arg0, %c0_i32, %c0_i32_0, %c0_i32_1 : i32, i32, i32, i32
  }
}

</mosaic_0001>

<llo_original>
// kernel: spatial_attention.1
$region0: #{spatial_attention.1}
  #allocation0 [shape = 'u32[]', space=smem, size = 0x4, offset = 0x4, fixed_abs, tag = 'smem constant byte address 0x4 - core index']
  #allocation1 [shape = 'u32[144,128]{1,0:T(1,128)}', space=vmem, size = 0x12000, scoped, tag = 'internal scratch']
  %s0 = inlined_call_operand.vmem [shape: f32[2,64,16,16], index: 0, kind: input, shape index: {}]
  %s1 = inlined_call_operand.vmem [shape: f32[7,16,16], index: 1, kind: input, shape index: {}]
  %s2 = inlined_call_operand.vmem [shape: f32[2,7,16,16], index: 2, kind: input, shape index: {}]
  %s3 = inlined_call_operand.hbm [shape: f32[2,1,16,16], index: 3, kind: output, shape index: {}]
  %s4 = sld [smem:[#allocation0]]
  $region45: #{spatial_attention.1} parent=0
    _
  %s6 = ssub.s32 1, %s4
  %s7 = scalar_select 0, %s6, %s4
  $region1: #{spatial_attention.1} parent=0
    #allocation2 [shape = 'u8[16384]{0}', space=vmem, size = 0x4000, scoped, tag = 'output window, operand 0']
    #allocation3 [shape = 's32[2]{0}', space=sflag, size = 0x8, scoped, tag = 'scoped memory for spatial_attention.1']
    %8 = vsyncpa [#allocation3], 0
    %s9 = scalar_lea.sflag [#allocation3], 1
    %10 = vsyncpa %s9, 0
    loop: start=0, step=1, limit=4
    $region2: #{spatial_attention.1} parent=1 // loop_pre_header
      _
    $region3: #{spatial_attention.1} parent=1 // loop_header
      %s12 = sphi 0, %s16
      %p13 = scmp.ge.s32.totalorder %s12, 4
      %s22 = sphi 0, %s24
      %s25 = sphi 0, %s22
      %s26 = sphi 0, %s25
      %s42 = sphi 0, %s26
      %s46 = sphi 0, %s46
      %s48 = sphi 0, %s46
      %s49 = sphi 0, %s48
      %s63 = sphi 0, %s49
      %s67 = sphi 0, %s67
      %s69 = sphi 0, %s67
      %s70 = sphi 0, %s69
      %s84 = sphi 0, %s70
      %s90 = sphi 0, %s92
      %s93 = sphi 0, %s90
      %s94 = sphi 0, %s93
      %s110 = sphi 0, %s94
    $region4: #{spatial_attention.1} parent=1 // loop_header_branch
      %15 = sbr.rel (%p13) target = $region8
    $region5: #{spatial_attention.1} parent=1 // loop_body
      %s17 = ssub.s32 %s12, 1
      %s18 = ssub.s32 %s12, 2
      %s19 = sadd.s32 %s12, 1
      %s20 = ssub.s32 %s12, %s19
      %p21 = scmp.eq.s32.totalorder %s20, 0
      %s23 = sadd.s32 %s22, 1
      %s24 = scalar_select %p21, %s22, %s23
      %p27 = pneg %p21
      %p28 = scmp.eq.s32.totalorder %s12, 1
      %p29 = por %p27, %p28
      %p30 = scmp.ne.s32.totalorder %s22, %s25
      %p31 = scmp.eq.s32.totalorder %s12, 0
      %p32 = por %p30, %p31
      %p33 = scmp.ne.s32.totalorder %s22, %s25
      %p34 = scmp.eq.s32.totalorder %s17, 1
      %p35 = por %p33, %p34
      %p36 = scmp.ne.s32.totalorder %s25, %s26
      %p37 = scmp.eq.s32.totalorder %s17, 0
      %p38 = por %p36, %p37
      %p39 = scmp.ne.s32.totalorder %s25, %s26
      %p40 = scmp.eq.s32.totalorder %s18, 1
      %p41 = por %p39, %p40
      %p43 = scmp.ne.s32.totalorder %s26, %s42
      %p44 = scmp.eq.s32.totalorder %s18, 0
      %p45 = por %p43, %p44
      %s47 = sadd.s32 %s46, 1
      %p50 = scmp.eq.s32.totalorder %s12, 1
      %p51 = scmp.ne.s32.totalorder %s46, %s48
      %p52 = scmp.eq.s32.totalorder %s12, 0
      %p53 = por %p51, %p52
      %p54 = scmp.ne.s32.totalorder %s46, %s48
      %p55 = scmp.eq.s32.totalorder %s17, 1
      %p56 = por %p54, %p55
      %p57 = scmp.ne.s32.totalorder %s48, %s49
      %p58 = scmp.eq.s32.totalorder %s17, 0
      %p59 = por %p57, %p58
      %p60 = scmp.ne.s32.totalorder %s48, %s49
      %p61 = scmp.eq.s32.totalorder %s18, 1
      %p62 = por %p60, %p61
      %p64 = scmp.ne.s32.totalorder %s49, %s63
      %p65 = scmp.eq.s32.totalorder %s18, 0
      %p66 = por %p64, %p65
      %s68 = sadd.s32 %s67, 1
      %p71 = scmp.eq.s32.totalorder %s12, 1
      %p72 = scmp.ne.s32.totalorder %s67, %s69
      %p73 = scmp.eq.s32.totalorder %s12, 0
      %p74 = por %p72, %p73
      %p75 = scmp.ne.s32.totalorder %s67, %s69
      %p76 = scmp.eq.s32.totalorder %s17, 1
      %p77 = por %p75, %p76
      %p78 = scmp.ne.s32.totalorder %s69, %s70
      %p79 = scmp.eq.s32.totalorder %s17, 0
      %p80 = por %p78, %p79
      %p81 = scmp.ne.s32.totalorder %s69, %s70
      %p82 = scmp.eq.s32.totalorder %s18, 1
      %p83 = por %p81, %p82
      %p85 = scmp.ne.s32.totalorder %s70, %s84
      %p86 = scmp.eq.s32.totalorder %s18, 0
      %p87 = por %p85, %p86
      %s88 = ssub.s32 %s12, %s19
      %p89 = scmp.eq.s32.totalorder %s88, 0
      %s91 = sadd.s32 %s90, 1
      %s92 = scalar_select %p89, %s90, %s91
      %p95 = pneg %p89
      %p96 = scmp.eq.s32.totalorder %s12, 1
      %p97 = por %p95, %p96
      %p98 = scmp.ne.s32.totalorder %s90, %s93
      %p99 = scmp.eq.s32.totalorder %s12, 0
      %p100 = por %p98, %p99
      %p101 = scmp.ne.s32.totalorder %s90, %s93
      %p102 = scmp.eq.s32.totalorder %s17, 1
      %p103 = por %p101, %p102
      %p104 = scmp.ne.s32.totalorder %s93, %s94
      %p105 = scmp.eq.s32.totalorder %s17, 0
      %p106 = por %p104, %p105
      %p107 = scmp.ne.s32.totalorder %s93, %s94
      %p108 = scmp.eq.s32.totalorder %s18, 1
      %p109 = por %p107, %p108
      %p111 = scmp.ne.s32.totalorder %s94, %s110
      %p112 = scmp.eq.s32.totalorder %s18, 0
      %p113 = por %p111, %p112
      %p114 = scmp.le.s32.totalorder 1, %s12
      %p115 = scmp.lt.s32.totalorder %s12, 3
      %p116 = pnand %p114, %p115
      %p117 = pneg %p116
      // Predicated region
      $region9: #{spatial_attention.1} parent=5 // pred_check
        _
      $region10: #{spatial_attention.1} parent=5 // pred_check_branch
        %119 = sbr.rel (%p116) target = $region12
      $region11: #{spatial_attention.1} parent=5 // pred_region
        %s120 = ssub.s32 %s12, 1
        // Predicated region
        $region13: #{spatial_attention.1} parent=11 // pred_check
          %p121 = pneg %p59
        $region14: #{spatial_attention.1} parent=11 // pred_check_branch
          %123 = sbr.rel (%p121) target = $region16
        $region15: #{spatial_attention.1} parent=11 // pred_region
          _
        $region16: #{spatial_attention.1} parent=11 // pred_fallthru
          _
        // Predicated region
        $region17: #{spatial_attention.1} parent=11 // pred_check
          %p124 = pneg %p80
        $region18: #{spatial_attention.1} parent=11 // pred_check_branch
          %126 = sbr.rel (%p124) target = $region20
        $region19: #{spatial_attention.1} parent=11 // pred_region
          _
        $region20: #{spatial_attention.1} parent=11 // pred_fallthru
          _
      $region12: #{spatial_attention.1} parent=5 // pred_fallthru
        _
      %p127 = scmp.lt.s32.totalorder %s12, 2
      // Predicated region
      $region21: #{spatial_attention.1} parent=5 // pred_check
        %p128 = pneg %p127
      $region22: #{spatial_attention.1} parent=5 // pred_check_branch
        %130 = sbr.rel (%p128) target = $region24
      $region23: #{spatial_attention.1} parent=5 // pred_region
        // Predicated region
        $region25: #{spatial_attention.1} parent=23 // pred_check
          %p131 = pneg %p32
        $region26: #{spatial_attention.1} parent=23 // pred_check_branch
          %133 = sbr.rel (%p131) target = $region28
        $region27: #{spatial_attention.1} parent=23 // pred_region
          %p134 = scmp.lt.s32.totalorder %s12, 1
          %s135 = scalar_select %p134, %s12, 1
          %s136 = smul.addr %s135, 128
          %s137 = smul.addr %s136, 8
          %s138 = scalar_lea.vmem %s0, %s137
        $region28: #{spatial_attention.1} parent=23 // pred_fallthru
          _
      $region24: #{spatial_attention.1} parent=5 // pred_fallthru
        _
      %p139 = scmp.le.s32.totalorder 1, %s12
      %p140 = scmp.lt.s32.totalorder %s12, 3
      %p141 = pnand %p139, %p140
      %p142 = pneg %p141
      // Predicated region
      $region29: #{spatial_attention.1} parent=5 // pred_check
        _
      $region30: #{spatial_attention.1} parent=5 // pred_check_branch
        %144 = sbr.rel (%p141) target = $region32
      $region31: #{spatial_attention.1} parent=5 // pred_region
        %s145 = ssub.s32 %s12, 1
        %p146 = scmp.lt.s32.totalorder %s17, 1
        %s147 = scalar_select %p146, %s17, 1
        %s148 = smul.addr %s147, 128
        %s149 = smul.addr %s148, 8
        %s150 = scalar_lea.vmem %s0, %s149
        %p151 = pneg %p38
        %p152 = pneg %p35
        %p153 = pneg %p59
        %p154 = pneg %p56
        %p155 = pneg %p80
        %p156 = pneg %p77
        %p157 = pneg %p106
        %p158 = pneg %p103
        %s159 = sand.u32 %s93, 1
        %s160 = scalar_lea.sflag [#allocation3], %s159
        %s161 = sand.u32 %s93, 1
        %s162 = smul.addr %s161, 16
        %s163 = scalar_lea.vmem [#allocation2], %s162
        %p164 = scmp.lt.s32.totalorder %s17, 1
        %s165 = scalar_select %p164, %s17, 1
        %s166 = smul.addr %s165, 128
        %s167 = smul.addr %s166, 8
        %s168 = scalar_lea.vmem %s0, %s167
        %v169 = vld [vmem:[%s168] sm:$0xff]
        %v170 = vld [vmem:[%s168 + $0x8] sm:$0xff]
        %v171 = vld [vmem:[%s168 + $0x10] sm:$0xff]
        %v172 = vld [vmem:[%s168 + $0x18] sm:$0xff]
        %v173 = vld [vmem:[%s168 + $0x20] sm:$0xff]
        %v174 = vld [vmem:[%s168 + $0x28] sm:$0xff]
        %v175 = vld [vmem:[%s168 + $0x30] sm:$0xff]
        %v176 = vld [vmem:[%s168 + $0x38] sm:$0xff]
        %v177 = vld [vmem:[%s168 + $0x40] sm:$0xff]
        %v178 = vld [vmem:[%s168 + $0x48] sm:$0xff]
        %v179 = vld [vmem:[%s168 + $0x50] sm:$0xff]
        %v180 = vld [vmem:[%s168 + $0x58] sm:$0xff]
        %v181 = vld [vmem:[%s168 + $0x60] sm:$0xff]
        %v182 = vld [vmem:[%s168 + $0x68] sm:$0xff]
        %v183 = vld [vmem:[%s168 + $0x70] sm:$0xff]
        %v184 = vld [vmem:[%s168 + $0x78] sm:$0xff]
        %v185 = vld [vmem:[%s168 + $0x80] sm:$0xff]
        %v186 = vld [vmem:[%s168 + $0x88] sm:$0xff]
        %v187 = vld [vmem:[%s168 + $0x90] sm:$0xff]
        %v188 = vld [vmem:[%s168 + $0x98] sm:$0xff]
        %v189 = vld [vmem:[%s168 + $0xa0] sm:$0xff]
        %v190 = vld [vmem:[%s168 + $0xa8] sm:$0xff]
        %v191 = vld [vmem:[%s168 + $0xb0] sm:$0xff]
        %v192 = vld [vmem:[%s168 + $0xb8] sm:$0xff]
        %v193 = vld [vmem:[%s168 + $0xc0] sm:$0xff]
        %v194 = vld [vmem:[%s168 + $0xc8] sm:$0xff]
        %v195 = vld [vmem:[%s168 + $0xd0] sm:$0xff]
        %v196 = vld [vmem:[%s168 + $0xd8] sm:$0xff]
        %v197 = vld [vmem:[%s168 + $0xe0] sm:$0xff]
        %v198 = vld [vmem:[%s168 + $0xe8] sm:$0xff]
        %v199 = vld [vmem:[%s168 + $0xf0] sm:$0xff]
        %v200 = vld [vmem:[%s168 + $0xf8] sm:$0xff]
        %v201 = vld [vmem:[%s168 + $0x100] sm:$0xff]
        %v202 = vld [vmem:[%s168 + $0x108] sm:$0xff]
        %v203 = vld [vmem:[%s168 + $0x110] sm:$0xff]
        %v204 = vld [vmem:[%s168 + $0x118] sm:$0xff]
        %v205 = vld [vmem:[%s168 + $0x120] sm:$0xff]
        %v206 = vld [vmem:[%s168 + $0x128] sm:$0xff]
        %v207 = vld [vmem:[%s168 + $0x130] sm:$0xff]
        %v208 = vld [vmem:[%s168 + $0x138] sm:$0xff]
        %v209 = vld [vmem:[%s168 + $0x140] sm:$0xff]
        %v210 = vld [vmem:[%s168 + $0x148] sm:$0xff]
        %v211 = vld [vmem:[%s168 + $0x150] sm:$0xff]
        %v212 = vld [vmem:[%s168 + $0x158] sm:$0xff]
        %v213 = vld [vmem:[%s168 + $0x160] sm:$0xff]
        %v214 = vld [vmem:[%s168 + $0x168] sm:$0xff]
        %v215 = vld [vmem:[%s168 + $0x170] sm:$0xff]
        %v216 = vld [vmem:[%s168 + $0x178] sm:$0xff]
        %v217 = vld [vmem:[%s168 + $0x180] sm:$0xff]
        %v218 = vld [vmem:[%s168 + $0x188] sm:$0xff]
        %v219 = vld [vmem:[%s168 + $0x190] sm:$0xff]
        %v220 = vld [vmem:[%s168 + $0x198] sm:$0xff]
        %v221 = vld [vmem:[%s168 + $0x1a0] sm:$0xff]
        %v222 = vld [vmem:[%s168 + $0x1a8] sm:$0xff]
        %v223 = vld [vmem:[%s168 + $0x1b0] sm:$0xff]
        %v224 = vld [vmem:[%s168 + $0x1b8] sm:$0xff]
        %v225 = vld [vmem:[%s168 + $0x1c0] sm:$0xff]
        %v226 = vld [vmem:[%s168 + $0x1c8] sm:$0xff]
        %v227 = vld [vmem:[%s168 + $0x1d0] sm:$0xff]
        %v228 = vld [vmem:[%s168 + $0x1d8] sm:$0xff]
        %v229 = vld [vmem:[%s168 + $0x1e0] sm:$0xff]
        %v230 = vld [vmem:[%s168 + $0x1e8] sm:$0xff]
        %v231 = vld [vmem:[%s168 + $0x1f0] sm:$0xff]
        %v232 = vld [vmem:[%s168 + $0x1f8] sm:$0xff]
        %v233 = vld [vmem:[%s168 + $0x200] sm:$0xff]
        %v234 = vld [vmem:[%s168 + $0x208] sm:$0xff]
        %v235 = vld [vmem:[%s168 + $0x210] sm:$0xff]
        %v236 = vld [vmem:[%s168 + $0x218] sm:$0xff]
        %v237 = vld [vmem:[%s168 + $0x220] sm:$0xff]
        %v238 = vld [vmem:[%s168 + $0x228] sm:$0xff]
        %v239 = vld [vmem:[%s168 + $0x230] sm:$0xff]
        %v240 = vld [vmem:[%s168 + $0x238] sm:$0xff]
        %v241 = vld [vmem:[%s168 + $0x240] sm:$0xff]
        %v242 = vld [vmem:[%s168 + $0x248] sm:$0xff]
        %v243 = vld [vmem:[%s168 + $0x250] sm:$0xff]
        %v244 = vld [vmem:[%s168 + $0x258] sm:$0xff]
        %v245 = vld [vmem:[%s168 + $0x260] sm:$0xff]
        %v246 = vld [vmem:[%s168 + $0x268] sm:$0xff]
        %v247 = vld [vmem:[%s168 + $0x270] sm:$0xff]
        %v248 = vld [vmem:[%s168 + $0x278] sm:$0xff]
        %v249 = vld [vmem:[%s168 + $0x280] sm:$0xff]
        %v250 = vld [vmem:[%s168 + $0x288] sm:$0xff]
        %v251 = vld [vmem:[%s168 + $0x290] sm:$0xff]
        %v252 = vld [vmem:[%s168 + $0x298] sm:$0xff]
        %v253 = vld [vmem:[%s168 + $0x2a0] sm:$0xff]
        %v254 = vld [vmem:[%s168 + $0x2a8] sm:$0xff]
        %v255 = vld [vmem:[%s168 + $0x2b0] sm:$0xff]
        %v256 = vld [vmem:[%s168 + $0x2b8] sm:$0xff]
        %v257 = vld [vmem:[%s168 + $0x2c0] sm:$0xff]
        %v258 = vld [vmem:[%s168 + $0x2c8] sm:$0xff]
        %v259 = vld [vmem:[%s168 + $0x2d0] sm:$0xff]
        %v260 = vld [vmem:[%s168 + $0x2d8] sm:$0xff]
        %v261 = vld [vmem:[%s168 + $0x2e0] sm:$0xff]
        %v262 = vld [vmem:[%s168 + $0x2e8] sm:$0xff]
        %v263 = vld [vmem:[%s168 + $0x2f0] sm:$0xff]
        %v264 = vld [vmem:[%s168 + $0x2f8] sm:$0xff]
        %v265 = vld [vmem:[%s168 + $0x300] sm:$0xff]
        %v266 = vld [vmem:[%s168 + $0x308] sm:$0xff]
        %v267 = vld [vmem:[%s168 + $0x310] sm:$0xff]
        %v268 = vld [vmem:[%s168 + $0x318] sm:$0xff]
        %v269 = vld [vmem:[%s168 + $0x320] sm:$0xff]
        %v270 = vld [vmem:[%s168 + $0x328] sm:$0xff]
        %v271 = vld [vmem:[%s168 + $0x330] sm:$0xff]
        %v272 = vld [vmem:[%s168 + $0x338] sm:$0xff]
        %v273 = vld [vmem:[%s168 + $0x340] sm:$0xff]
        %v274 = vld [vmem:[%s168 + $0x348] sm:$0xff]
        %v275 = vld [vmem:[%s168 + $0x350] sm:$0xff]
        %v276 = vld [vmem:[%s168 + $0x358] sm:$0xff]
        %v277 = vld [vmem:[%s168 + $0x360] sm:$0xff]
        %v278 = vld [vmem:[%s168 + $0x368] sm:$0xff]
        %v279 = vld [vmem:[%s168 + $0x370] sm:$0xff]
        %v280 = vld [vmem:[%s168 + $0x378] sm:$0xff]
        %v281 = vld [vmem:[%s168 + $0x380] sm:$0xff]
        %v282 = vld [vmem:[%s168 + $0x388] sm:$0xff]
        %v283 = vld [vmem:[%s168 + $0x390] sm:$0xff]
        %v284 = vld [vmem:[%s168 + $0x398] sm:$0xff]
        %v285 = vld [vmem:[%s168 + $0x3a0] sm:$0xff]
        %v286 = vld [vmem:[%s168 + $0x3a8] sm:$0xff]
        %v287 = vld [vmem:[%s168 + $0x3b0] sm:$0xff]
        %v288 = vld [vmem:[%s168 + $0x3b8] sm:$0xff]
        %v289 = vld [vmem:[%s168 + $0x3c0] sm:$0xff]
        %v290 = vld [vmem:[%s168 + $0x3c8] sm:$0xff]
        %v291 = vld [vmem:[%s168 + $0x3d0] sm:$0xff]
        %v292 = vld [vmem:[%s168 + $0x3d8] sm:$0xff]
        %v293 = vld [vmem:[%s168 + $0x3e0] sm:$0xff]
        %v294 = vld [vmem:[%s168 + $0x3e8] sm:$0xff]
        %v295 = vld [vmem:[%s168 + $0x3f0] sm:$0xff]
        %v296 = vld [vmem:[%s168 + $0x3f8] sm:$0xff]
        %vm297 = vcmask 130048
        %v298 = vsel %vm297, %v169, 0.0
        %v299 = vsel %vm297, %v171, 0.0
        %v300 = vadd.f32 %v298, %v299
        %v301 = vsel %vm297, %v173, 0.0
        %v302 = vadd.f32 %v300, %v301
        %v303 = vsel %vm297, %v175, 0.0
        %v304 = vadd.f32 %v302, %v303
        %v305 = vsel %vm297, %v177, 0.0
        %v306 = vadd.f32 %v304, %v305
        %v307 = vsel %vm297, %v179, 0.0
        %v308 = vadd.f32 %v306, %v307
        %v309 = vsel %vm297, %v181, 0.0
        %v310 = vadd.f32 %v308, %v309
        %v311 = vsel %vm297, %v183, 0.0
        %v312 = vadd.f32 %v310, %v311
        %v313 = vsel %vm297, %v185, 0.0
        %v314 = vadd.f32 %v312, %v313
        %v315 = vsel %vm297, %v187, 0.0
        %v316 = vadd.f32 %v314, %v315
        %v317 = vsel %vm297, %v189, 0.0
        %v318 = vadd.f32 %v316, %v317
        %v319 = vsel %vm297, %v191, 0.0
        %v320 = vadd.f32 %v318, %v319
        %v321 = vsel %vm297, %v193, 0.0
        %v322 = vadd.f32 %v320, %v321
        %v323 = vsel %vm297, %v195, 0.0
        %v324 = vadd.f32 %v322, %v323
        %v325 = vsel %vm297, %v197, 0.0
        %v326 = vadd.f32 %v324, %v325
        %v327 = vsel %vm297, %v199, 0.0
        %v328 = vadd.f32 %v326, %v327
        %v329 = vsel %vm297, %v201, 0.0
        %v330 = vadd.f32 %v328, %v329
        %v331 = vsel %vm297, %v203, 0.0
        %v332 = vadd.f32 %v330, %v331
        %v333 = vsel %vm297, %v205, 0.0
        %v334 = vadd.f32 %v332, %v333
        %v335 = vsel %vm297, %v207, 0.0
        %v336 = vadd.f32 %v334, %v335
        %v337 = vsel %vm297, %v209, 0.0
        %v338 = vadd.f32 %v336, %v337
        %v339 = vsel %vm297, %v211, 0.0
        %v340 = vadd.f32 %v338, %v339
        %v341 = vsel %vm297, %v213, 0.0
        %v342 = vadd.f32 %v340, %v341
        %v343 = vsel %vm297, %v215, 0.0
        %v344 = vadd.f32 %v342, %v343
        %v345 = vsel %vm297, %v217, 0.0
        %v346 = vadd.f32 %v344, %v345
        %v347 = vsel %vm297, %v219, 0.0
        %v348 = vadd.f32 %v346, %v347
        %v349 = vsel %vm297, %v221, 0.0
        %v350 = vadd.f32 %v348, %v349
        %v351 = vsel %vm297, %v223, 0.0
        %v352 = vadd.f32 %v350, %v351
        %v353 = vsel %vm297, %v225, 0.0
        %v354 = vadd.f32 %v352, %v353
        %v355 = vsel %vm297, %v227, 0.0
        %v356 = vadd.f32 %v354, %v355
        %v357 = vsel %vm297, %v229, 0.0
        %v358 = vadd.f32 %v356, %v357
        %v359 = vsel %vm297, %v231, 0.0
        %v360 = vadd.f32 %v358, %v359
        %v361 = vsel %vm297, %v233, 0.0
        %v362 = vadd.f32 %v360, %v361
        %v363 = vsel %vm297, %v235, 0.0
        %v364 = vadd.f32 %v362, %v363
        %v365 = vsel %vm297, %v237, 0.0
        %v366 = vadd.f32 %v364, %v365
        %v367 = vsel %vm297, %v239, 0.0
        %v368 = vadd.f32 %v366, %v367
        %v369 = vsel %vm297, %v241, 0.0
        %v370 = vadd.f32 %v368, %v369
        %v371 = vsel %vm297, %v243, 0.0
        %v372 = vadd.f32 %v370, %v371
        %v373 = vsel %vm297, %v245, 0.0
        %v374 = vadd.f32 %v372, %v373
        %v375 = vsel %vm297, %v247, 0.0
        %v376 = vadd.f32 %v374, %v375
        %v377 = vsel %vm297, %v249, 0.0
        %v378 = vadd.f32 %v376, %v377
        %v379 = vsel %vm297, %v251, 0.0
        %v380 = vadd.f32 %v378, %v379
        %v381 = vsel %vm297, %v253, 0.0
        %v382 = vadd.f32 %v380, %v381
        %v383 = vsel %vm297, %v255, 0.0
        %v384 = vadd.f32 %v382, %v383
        %v385 = vsel %vm297, %v257, 0.0
        %v386 = vadd.f32 %v384, %v385
        %v387 = vsel %vm297, %v259, 0.0
        %v388 = vadd.f32 %v386, %v387
        %v389 = vsel %vm297, %v261, 0.0
        %v390 = vadd.f32 %v388, %v389
        %v391 = vsel %vm297, %v263, 0.0
        %v392 = vadd.f32 %v390, %v391
        %v393 = vsel %vm297, %v265, 0.0
        %v394 = vadd.f32 %v392, %v393
        %v395 = vsel %vm297, %v267, 0.0
        %v396 = vadd.f32 %v394, %v395
        %v397 = vsel %vm297, %v269, 0.0
        %v398 = vadd.f32 %v396, %v397
        %v399 = vsel %vm297, %v271, 0.0
        %v400 = vadd.f32 %v398, %v399
        %v401 = vsel %vm297, %v273, 0.0
        %v402 = vadd.f32 %v400, %v401
        %v403 = vsel %vm297, %v275, 0.0
        %v404 = vadd.f32 %v402, %v403
        %v405 = vsel %vm297, %v277, 0.0
        %v406 = vadd.f32 %v404, %v405
        %v407 = vsel %vm297, %v279, 0.0
        %v408 = vadd.f32 %v406, %v407
        %v409 = vsel %vm297, %v281, 0.0
        %v410 = vadd.f32 %v408, %v409
        %v411 = vsel %vm297, %v283, 0.0
        %v412 = vadd.f32 %v410, %v411
        %v413 = vsel %vm297, %v285, 0.0
        %v414 = vadd.f32 %v412, %v413
        %v415 = vsel %vm297, %v287, 0.0
        %v416 = vadd.f32 %v414, %v415
        %v417 = vsel %vm297, %v289, 0.0
        %v418 = vadd.f32 %v416, %v417
        %v419 = vsel %vm297, %v291, 0.0
        %v420 = vadd.f32 %v418, %v419
        %v421 = vsel %vm297, %v293, 0.0
        %v422 = vadd.f32 %v420, %v421
        %v423 = vsel %vm297, %v295, 0.0
        %v424 = vadd.f32 %v422, %v423
        %v425 = vsel %vm297, %v170, 0.0
        %v426 = vsel %vm297, %v172, 0.0
        %v427 = vadd.f32 %v425, %v426
        %v428 = vsel %vm297, %v174, 0.0
        %v429 = vadd.f32 %v427, %v428
        %v430 = vsel %vm297, %v176, 0.0
        %v431 = vadd.f32 %v429, %v430
        %v432 = vsel %vm297, %v178, 0.0
        %v433 = vadd.f32 %v431, %v432
        %v434 = vsel %vm297, %v180, 0.0
        %v435 = vadd.f32 %v433, %v434
        %v436 = vsel %vm297, %v182, 0.0
        %v437 = vadd.f32 %v435, %v436
        %v438 = vsel %vm297, %v184, 0.0
        %v439 = vadd.f32 %v437, %v438
        %v440 = vsel %vm297, %v186, 0.0
        %v441 = vadd.f32 %v439, %v440
        %v442 = vsel %vm297, %v188, 0.0
        %v443 = vadd.f32 %v441, %v442
        %v444 = vsel %vm297, %v190, 0.0
        %v445 = vadd.f32 %v443, %v444
        %v446 = vsel %vm297, %v192, 0.0
        %v447 = vadd.f32 %v445, %v446
        %v448 = vsel %vm297, %v194, 0.0
        %v449 = vadd.f32 %v447, %v448
        %v450 = vsel %vm297, %v196, 0.0
        %v451 = vadd.f32 %v449, %v450
        %v452 = vsel %vm297, %v198, 0.0
        %v453 = vadd.f32 %v451, %v452
        %v454 = vsel %vm297, %v200, 0.0
        %v455 = vadd.f32 %v453, %v454
        %v456 = vsel %vm297, %v202, 0.0
        %v457 = vadd.f32 %v455, %v456
        %v458 = vsel %vm297, %v204, 0.0
        %v459 = vadd.f32 %v457, %v458
        %v460 = vsel %vm297, %v206, 0.0
        %v461 = vadd.f32 %v459, %v460
        %v462 = vsel %vm297, %v208, 0.0
        %v463 = vadd.f32 %v461, %v462
        %v464 = vsel %vm297, %v210, 0.0
        %v465 = vadd.f32 %v463, %v464
        %v466 = vsel %vm297, %v212, 0.0
        %v467 = vadd.f32 %v465, %v466
        %v468 = vsel %vm297, %v214, 0.0
        %v469 = vadd.f32 %v467, %v468
        %v470 = vsel %vm297, %v216, 0.0
        %v471 = vadd.f32 %v469, %v470
        %v472 = vsel %vm297, %v218, 0.0
        %v473 = vadd.f32 %v471, %v472
        %v474 = vsel %vm297, %v220, 0.0
        %v475 = vadd.f32 %v473, %v474
        %v476 = vsel %vm297, %v222, 0.0
        %v477 = vadd.f32 %v475, %v476
        %v478 = vsel %vm297, %v224, 0.0
        %v479 = vadd.f32 %v477, %v478
        %v480 = vsel %vm297, %v226, 0.0
        %v481 = vadd.f32 %v479, %v480
        %v482 = vsel %vm297, %v228, 0.0
        %v483 = vadd.f32 %v481, %v482
        %v484 = vsel %vm297, %v230, 0.0
        %v485 = vadd.f32 %v483, %v484
        %v486 = vsel %vm297, %v232, 0.0
        %v487 = vadd.f32 %v485, %v486
        %v488 = vsel %vm297, %v234, 0.0
        %v489 = vadd.f32 %v487, %v488
        %v490 = vsel %vm297, %v236, 0.0
        %v491 = vadd.f32 %v489, %v490
        %v492 = vsel %vm297, %v238, 0.0
        %v493 = vadd.f32 %v491, %v492
        %v494 = vsel %vm297, %v240, 0.0
        %v495 = vadd.f32 %v493, %v494
        %v496 = vsel %vm297, %v242, 0.0
        %v497 = vadd.f32 %v495, %v496
        %v498 = vsel %vm297, %v244, 0.0
        %v499 = vadd.f32 %v497, %v498
        %v500 = vsel %vm297, %v246, 0.0
        %v501 = vadd.f32 %v499, %v500
        %v502 = vsel %vm297, %v248, 0.0
        %v503 = vadd.f32 %v501, %v502
        %v504 = vsel %vm297, %v250, 0.0
        %v505 = vadd.f32 %v503, %v504
        %v506 = vsel %vm297, %v252, 0.0
        %v507 = vadd.f32 %v505, %v506
        %v508 = vsel %vm297, %v254, 0.0
        %v509 = vadd.f32 %v507, %v508
        %v510 = vsel %vm297, %v256, 0.0
        %v511 = vadd.f32 %v509, %v510
        %v512 = vsel %vm297, %v258, 0.0
        %v513 = vadd.f32 %v511, %v512
        %v514 = vsel %vm297, %v260, 0.0
        %v515 = vadd.f32 %v513, %v514
        %v516 = vsel %vm297, %v262, 0.0
        %v517 = vadd.f32 %v515, %v516
        %v518 = vsel %vm297, %v264, 0.0
        %v519 = vadd.f32 %v517, %v518
        %v520 = vsel %vm297, %v266, 0.0
        %v521 = vadd.f32 %v519, %v520
        %v522 = vsel %vm297, %v268, 0.0
        %v523 = vadd.f32 %v521, %v522
        %v524 = vsel %vm297, %v270, 0.0
        %v525 = vadd.f32 %v523, %v524
        %v526 = vsel %vm297, %v272, 0.0
        %v527 = vadd.f32 %v525, %v526
        %v528 = vsel %vm297, %v274, 0.0
        %v529 = vadd.f32 %v527, %v528
        %v530 = vsel %vm297, %v276, 0.0
        %v531 = vadd.f32 %v529, %v530
        %v532 = vsel %vm297, %v278, 0.0
        %v533 = vadd.f32 %v531, %v532
        %v534 = vsel %vm297, %v280, 0.0
        %v535 = vadd.f32 %v533, %v534
        %v536 = vsel %vm297, %v282, 0.0
        %v537 = vadd.f32 %v535, %v536
        %v538 = vsel %vm297, %v284, 0.0
        %v539 = vadd.f32 %v537, %v538
        %v540 = vsel %vm297, %v286, 0.0
        %v541 = vadd.f32 %v539, %v540
        %v542 = vsel %vm297, %v288, 0.0
        %v543 = vadd.f32 %v541, %v542
        %v544 = vsel %vm297, %v290, 0.0
        %v545 = vadd.f32 %v543, %v544
        %v546 = vsel %vm297, %v292, 0.0
        %v547 = vadd.f32 %v545, %v546
        %v548 = vsel %vm297, %v294, 0.0
        %v549 = vadd.f32 %v547, %v548
        %v550 = vsel %vm297, %v296, 0.0
        %v551 = vadd.f32 %v549, %v550
        %v552 = vrcp.pop 64.0
        %v553 = vmul.f32 %v424, %v552
        %v554 = vmul.f32 %v551, %v552
        %v555 = vsel %vm297, %v169, -inf
        %v556 = vsel %vm297, %v171, -inf
        %v557 = vsel %vm297, %v173, -inf
        %v558 = vmax.f32 %v555, %v557
        %v559 = vsel %vm297, %v175, -inf
        %v560 = vmax.f32 %v556, %v559
        %v561 = vsel %vm297, %v177, -inf
        %v562 = vmax.f32 %v558, %v561
        %v563 = vsel %vm297, %v179, -inf
        %v564 = vmax.f32 %v560, %v563
        %v565 = vsel %vm297, %v181, -inf
        %v566 = vmax.f32 %v562, %v565
        %v567 = vsel %vm297, %v183, -inf
        %v568 = vmax.f32 %v564, %v567
        %v569 = vsel %vm297, %v185, -inf
        %v570 = vmax.f32 %v566, %v569
        %v571 = vsel %vm297, %v187, -inf
        %v572 = vmax.f32 %v568, %v571
        %v573 = vsel %vm297, %v189, -inf
        %v574 = vmax.f32 %v570, %v573
        %v575 = vsel %vm297, %v191, -inf
        %v576 = vmax.f32 %v572, %v575
        %v577 = vsel %vm297, %v193, -inf
        %v578 = vmax.f32 %v574, %v577
        %v579 = vsel %vm297, %v195, -inf
        %v580 = vmax.f32 %v576, %v579
        %v581 = vsel %vm297, %v197, -inf
        %v582 = vmax.f32 %v578, %v581
        %v583 = vsel %vm297, %v199, -inf
        %v584 = vmax.f32 %v580, %v583
        %v585 = vsel %vm297, %v201, -inf
        %v586 = vmax.f32 %v582, %v585
        %v587 = vsel %vm297, %v203, -inf
        %v588 = vmax.f32 %v584, %v587
        %v589 = vsel %vm297, %v205, -inf
        %v590 = vmax.f32 %v586, %v589
        %v591 = vsel %vm297, %v207, -inf
        %v592 = vmax.f32 %v588, %v591
        %v593 = vsel %vm297, %v209, -inf
        %v594 = vmax.f32 %v590, %v593
        %v595 = vsel %vm297, %v211, -inf
        %v596 = vmax.f32 %v592, %v595
        %v597 = vsel %vm297, %v213, -inf
        %v598 = vmax.f32 %v594, %v597
        %v599 = vsel %vm297, %v215, -inf
        %v600 = vmax.f32 %v596, %v599
        %v601 = vsel %vm297, %v217, -inf
        %v602 = vmax.f32 %v598, %v601
        %v603 = vsel %vm297, %v219, -inf
        %v604 = vmax.f32 %v600, %v603
        %v605 = vsel %vm297, %v221, -inf
        %v606 = vmax.f32 %v602, %v605
        %v607 = vsel %vm297, %v223, -inf
        %v608 = vmax.f32 %v604, %v607
        %v609 = vsel %vm297, %v225, -inf
        %v610 = vmax.f32 %v606, %v609
        %v611 = vsel %vm297, %v227, -inf
        %v612 = vmax.f32 %v608, %v611
        %v613 = vsel %vm297, %v229, -inf
        %v614 = vmax.f32 %v610, %v613
        %v615 = vsel %vm297, %v231, -inf
        %v616 = vmax.f32 %v612, %v615
        %v617 = vsel %vm297, %v233, -inf
        %v618 = vmax.f32 %v614, %v617
        %v619 = vsel %vm297, %v235, -inf
        %v620 = vmax.f32 %v616, %v619
        %v621 = vsel %vm297, %v237, -inf
        %v622 = vmax.f32 %v618, %v621
        %v623 = vsel %vm297, %v239, -inf
        %v624 = vmax.f32 %v620, %v623
        %v625 = vsel %vm297, %v241, -inf
        %v626 = vmax.f32 %v622, %v625
        %v627 = vsel %vm297, %v243, -inf
        %v628 = vmax.f32 %v624, %v627
        %v629 = vsel %vm297, %v245, -inf
        %v630 = vmax.f32 %v626, %v629
        %v631 = vsel %vm297, %v247, -inf
        %v632 = vmax.f32 %v628, %v631
        %v633 = vsel %vm297, %v249, -inf
        %v634 = vmax.f32 %v630, %v633
        %v635 = vsel %vm297, %v251, -inf
        %v636 = vmax.f32 %v632, %v635
        %v637 = vsel %vm297, %v253, -inf
        %v638 = vmax.f32 %v634, %v637
        %v639 = vsel %vm297, %v255, -inf
        %v640 = vmax.f32 %v636, %v639
        %v641 = vsel %vm297, %v257, -inf
        %v642 = vmax.f32 %v638, %v641
        %v643 = vsel %vm297, %v259, -inf
        %v644 = vmax.f32 %v640, %v643
        %v645 = vsel %vm297, %v261, -inf
        %v646 = vmax.f32 %v642, %v645
        %v647 = vsel %vm297, %v263, -inf
        %v648 = vmax.f32 %v644, %v647
        %v649 = vsel %vm297, %v265, -inf
        %v650 = vmax.f32 %v646, %v649
        %v651 = vsel %vm297, %v267, -inf
        %v652 = vmax.f32 %v648, %v651
        %v653 = vsel %vm297, %v269, -inf
        %v654 = vmax.f32 %v650, %v653
        %v655 = vsel %vm297, %v271, -inf
        %v656 = vmax.f32 %v652, %v655
        %v657 = vsel %vm297, %v273, -inf
        %v658 = vmax.f32 %v654, %v657
        %v659 = vsel %vm297, %v275, -inf
        %v660 = vmax.f32 %v656, %v659
        %v661 = vsel %vm297, %v277, -inf
        %v662 = vmax.f32 %v658, %v661
        %v663 = vsel %vm297, %v279, -inf
        %v664 = vmax.f32 %v660, %v663
        %v665 = vsel %vm297, %v281, -inf
        %v666 = vmax.f32 %v662, %v665
        %v667 = vsel %vm297, %v283, -inf
        %v668 = vmax.f32 %v664, %v667
        %v669 = vsel %vm297, %v285, -inf
        %v670 = vmax.f32 %v666, %v669
        %v671 = vsel %vm297, %v287, -inf
        %v672 = vmax.f32 %v668, %v671
        %v673 = vsel %vm297, %v289, -inf
        %v674 = vmax.f32 %v670, %v673
        %v675 = vsel %vm297, %v291, -inf
        %v676 = vmax.f32 %v672, %v675
        %v677 = vsel %vm297, %v293, -inf
        %v678 = vmax.f32 %v674, %v677
        %v679 = vsel %vm297, %v295, -inf
        %v680 = vmax.f32 %v676, %v679
        %v681 = vmax.f32 %v678, %v680
        %v682 = vsel %vm297, %v170, -inf
        %v683 = vsel %vm297, %v172, -inf
        %v684 = vsel %vm297, %v174, -inf
        %v685 = vmax.f32 %v682, %v684
        %v686 = vsel %vm297, %v176, -inf
        %v687 = vmax.f32 %v683, %v686
        %v688 = vsel %vm297, %v178, -inf
        %v689 = vmax.f32 %v685, %v688
        %v690 = vsel %vm297, %v180, -inf
        %v691 = vmax.f32 %v687, %v690
        %v692 = vsel %vm297, %v182, -inf
        %v693 = vmax.f32 %v689, %v692
        %v694 = vsel %vm297, %v184, -inf
        %v695 = vmax.f32 %v691, %v694
        %v696 = vsel %vm297, %v186, -inf
        %v697 = vmax.f32 %v693, %v696
        %v698 = vsel %vm297, %v188, -inf
        %v699 = vmax.f32 %v695, %v698
        %v700 = vsel %vm297, %v190, -inf
        %v701 = vmax.f32 %v697, %v700
        %v702 = vsel %vm297, %v192, -inf
        %v703 = vmax.f32 %v699, %v702
        %v704 = vsel %vm297, %v194, -inf
        %v705 = vmax.f32 %v701, %v704
        %v706 = vsel %vm297, %v196, -inf
        %v707 = vmax.f32 %v703, %v706
        %v708 = vsel %vm297, %v198, -inf
        %v709 = vmax.f32 %v705, %v708
        %v710 = vsel %vm297, %v200, -inf
        %v711 = vmax.f32 %v707, %v710
        %v712 = vsel %vm297, %v202, -inf
        %v713 = vmax.f32 %v709, %v712
        %v714 = vsel %vm297, %v204, -inf
        %v715 = vmax.f32 %v711, %v714
        %v716 = vsel %vm297, %v206, -inf
        %v717 = vmax.f32 %v713, %v716
        %v718 = vsel %vm297, %v208, -inf
        %v719 = vmax.f32 %v715, %v718
        %v720 = vsel %vm297, %v210, -inf
        %v721 = vmax.f32 %v717, %v720
        %v722 = vsel %vm297, %v212, -inf
        %v723 = vmax.f32 %v719, %v722
        %v724 = vsel %vm297, %v214, -inf
        %v725 = vmax.f32 %v721, %v724
        %v726 = vsel %vm297, %v216, -inf
        %v727 = vmax.f32 %v723, %v726
        %v728 = vsel %vm297, %v218, -inf
        %v729 = vmax.f32 %v725, %v728
        %v730 = vsel %vm297, %v220, -inf
        %v731 = vmax.f32 %v727, %v730
        %v732 = vsel %vm297, %v222, -inf
        %v733 = vmax.f32 %v729, %v732
        %v734 = vsel %vm297, %v224, -inf
        %v735 = vmax.f32 %v731, %v734
        %v736 = vsel %vm297, %v226, -inf
        %v737 = vmax.f32 %v733, %v736
        %v738 = vsel %vm297, %v228, -inf
        %v739 = vmax.f32 %v735, %v738
        %v740 = vsel %vm297, %v230, -inf
        %v741 = vmax.f32 %v737, %v740
        %v742 = vsel %vm297, %v232, -inf
        %v743 = vmax.f32 %v739, %v742
        %v744 = vsel %vm297, %v234, -inf
        %v745 = vmax.f32 %v741, %v744
        %v746 = vsel %vm297, %v236, -inf
        %v747 = vmax.f32 %v743, %v746
        %v748 = vsel %vm297, %v238, -inf
        %v749 = vmax.f32 %v745, %v748
        %v750 = vsel %vm297, %v240, -inf
        %v751 = vmax.f32 %v747, %v750
        %v752 = vsel %vm297, %v242, -inf
        %v753 = vmax.f32 %v749, %v752
        %v754 = vsel %vm297, %v244, -inf
        %v755 = vmax.f32 %v751, %v754
        %v756 = vsel %vm297, %v246, -inf
        %v757 = vmax.f32 %v753, %v756
        %v758 = vsel %vm297, %v248, -inf
        %v759 = vmax.f32 %v755, %v758
        %v760 = vsel %vm297, %v250, -inf
        %v761 = vmax.f32 %v757, %v760
        %v762 = vsel %vm297, %v252, -inf
        %v763 = vmax.f32 %v759, %v762
        %v764 = vsel %vm297, %v254, -inf
        %v765 = vmax.f32 %v761, %v764
        %v766 = vsel %vm297, %v256, -inf
        %v767 = vmax.f32 %v763, %v766
        %v768 = vsel %vm297, %v258, -inf
        %v769 = vmax.f32 %v765, %v768
        %v770 = vsel %vm297, %v260, -inf
        %v771 = vmax.f32 %v767, %v770
        %v772 = vsel %vm297, %v262, -inf
        %v773 = vmax.f32 %v769, %v772
        %v774 = vsel %vm297, %v264, -inf
        %v775 = vmax.f32 %v771, %v774
        %v776 = vsel %vm297, %v266, -inf
        %v777 = vmax.f32 %v773, %v776
        %v778 = vsel %vm297, %v268, -inf
        %v779 = vmax.f32 %v775, %v778
        %v780 = vsel %vm297, %v270, -inf
        %v781 = vmax.f32 %v777, %v780
        %v782 = vsel %vm297, %v272, -inf
        %v783 = vmax.f32 %v779, %v782
        %v784 = vsel %vm297, %v274, -inf
        %v785 = vmax.f32 %v781, %v784
        %v786 = vsel %vm297, %v276, -inf
        %v787 = vmax.f32 %v783, %v786
        %v788 = vsel %vm297, %v278, -inf
        %v789 = vmax.f32 %v785, %v788
        %v790 = vsel %vm297, %v280, -inf
        %v791 = vmax.f32 %v787, %v790
        %v792 = vsel %vm297, %v282, -inf
        %v793 = vmax.f32 %v789, %v792
        %v794 = vsel %vm297, %v284, -inf
        %v795 = vmax.f32 %v791, %v794
        %v796 = vsel %vm297, %v286, -inf
        %v797 = vmax.f32 %v793, %v796
        %v798 = vsel %vm297, %v288, -inf
        %v799 = vmax.f32 %v795, %v798
        %v800 = vsel %vm297, %v290, -inf
        %v801 = vmax.f32 %v797, %v800
        %v802 = vsel %vm297, %v292, -inf
        %v803 = vmax.f32 %v799, %v802
        %v804 = vsel %vm297, %v294, -inf
        %v805 = vmax.f32 %v801, %v804
        %v806 = vsel %vm297, %v296, -inf
        %v807 = vmax.f32 %v803, %v806
        %v808 = vmax.f32 %v805, %v807
        %v809 = vld [vmem:[%s2] sm:$0xff]
        %v810 = vld [vmem:[%s2 + $0x8] sm:$0xff]
        %s811 = scalar_lea.vmem %s2, 112
        %v812 = vld [vmem:[%s811] sm:$0xff]
        %v813 = vld [vmem:[%s811 + $0x8] sm:$0xff]
        %v815 = vsel %vm297, %v681, 0
        %v818 = vsel %vm297, %v808, 0
        %820 = vmatprep.subr.mxu0 0.0
        %821 = vmatpush1.msra.mxu0 %v812
        %822 = vmatprep.subr.mxu0 0.0
        %823 = vmatpush1.msra.mxu0 %v813
        %824 = vmatprep.subr.mxu0 0.0
        %825 = vmatpush1.msra.mxu0 0.0
        %826 = vmatprep.subr.mxu0 0.0
        %827 = vmatpush1.msra.mxu0 0.0
        %828 = vmatprep.subr.mxu0 0.0
        %829 = vmatpush1.msra.mxu0 0.0
        %830 = vmatprep.subr.mxu0 0.0
        %831 = vmatpush1.msra.mxu0 0.0
        %832 = vmatprep.subr.mxu0 0.0
        %833 = vmatpush1.msra.mxu0 0.0
        %834 = vmatprep.subr.mxu0 0.0
        %835 = vmatpush1.msra.mxu0 0.0
        %836 = vmatprep.subr.mxu0 0.0
        %837 = vmatpush1.msra.mxu0 0.0
        %838 = vmatprep.subr.mxu0 0.0
        %839 = vmatpush1.msra.mxu0 0.0
        %840 = vmatprep.subr.mxu0 0.0
        %841 = vmatpush1.msra.mxu0 0.0
        %842 = vmatprep.subr.mxu0 0.0
        %843 = vmatpush1.msra.mxu0 0.0
        %844 = vmatprep.subr.mxu0 0.0
        %845 = vmatpush1.msra.mxu0 0.0
        %846 = vmatprep.subr.mxu0 0.0
        %847 = vmatpush1.msra.mxu0 0.0
        %848 = vmatprep.subr.mxu0 0.0
        %849 = vmatpush1.msra.mxu0 0.0
        %850 = vmatprep.subr.mxu0 0.0
        %851 = vmatpush1.msra.mxu0 0.0
        %852 = vmatprep.subr.mxu0 0.0
        %853 = vmatpush1.msra.mxu0 0.0
        %854 = vmatprep.subr.mxu0 0.0
        %855 = vmatpush1.msra.mxu0 0.0
        %856 = vmatprep.subr.mxu0 0.0
        %857 = vmatpush1.msra.mxu0 0.0
        %858 = vmatprep.subr.mxu0 0.0
        %859 = vmatpush1.msra.mxu0 0.0
        %860 = vmatprep.subr.mxu0 0.0
        %861 = vmatpush1.msra.mxu0 0.0
        %862 = vmatprep.subr.mxu0 0.0
        %863 = vmatpush1.msra.mxu0 0.0
        %864 = vmatprep.subr.mxu0 0.0
        %865 = vmatpush1.msra.mxu0 0.0
        %866 = vmatprep.subr.mxu0 0.0
        %867 = vmatpush1.msra.mxu0 0.0
        %868 = vmatprep.subr.mxu0 0.0
        %869 = vmatpush1.msra.mxu0 0.0
        %870 = vmatprep.subr.mxu0 0.0
        %871 = vmatpush1.msra.mxu0 0.0
        %872 = vmatprep.subr.mxu0 0.0
        %873 = vmatpush1.msra.mxu0 0.0
        %874 = vmatprep.subr.mxu0 0.0
        %875 = vmatpush1.msra.mxu0 0.0
        %876 = vmatprep.subr.mxu0 0.0
        %877 = vmatpush1.msra.mxu0 0.0
        %878 = vmatprep.subr.mxu0 0.0
        %879 = vmatpush1.msra.mxu0 0.0
        %880 = vmatprep.subr.mxu0 0.0
        %881 = vmatpush1.msra.mxu0 0.0
        %882 = vmatprep.subr.mxu0 0.0
        %883 = vmatpush1.msra.mxu0 0.0
        %884 = vmatprep.mubr.f32.mxu0 0.0
        %885 = vmatmul.mubr.f32.gmra.mrb[0].mxu0 %v815
        %v886 = vpop.f32.mrb[0].mxu0
        %v887 = vadd.f32 0.0, %v886
        %v888 = vpop.f32.mrb[0].mxu0
        %889 = vmatprep.mubr.f32.mxu0 0.0
        %890 = vmatmul.mubr.f32.gmra.mrb[0].mxu0 %v818
        %v891 = vpop.f32.mrb[0].mxu0
        %v892 = vadd.f32 0.0, %v891
        %v893 = vpop.f32.mrb[0].mxu0
        %894 = vdwg.mxu0
        %v896 = vsel %vm297, %v553, 0
        %v899 = vsel %vm297, %v554, 0
        %901 = vmatprep.subr.mxu0 0.0
        %902 = vmatpush1.msra.mxu0 %v809
        %903 = vmatprep.subr.mxu0 0.0
        %904 = vmatpush1.msra.mxu0 %v810
        %905 = vmatprep.subr.mxu0 0.0
        %906 = vmatpush1.msra.mxu0 0.0
        %907 = vmatprep.subr.mxu0 0.0
        %908 = vmatpush1.msra.mxu0 0.0
        %909 = vmatprep.subr.mxu0 0.0
        %910 = vmatpush1.msra.mxu0 0.0
        %911 = vmatprep.subr.mxu0 0.0
        %912 = vmatpush1.msra.mxu0 0.0
        %913 = vmatprep.subr.mxu0 0.0
        %914 = vmatpush1.msra.mxu0 0.0
        %915 = vmatprep.subr.mxu0 0.0
        %916 = vmatpush1.msra.mxu0 0.0
        %917 = vmatprep.subr.mxu0 0.0
        %918 = vmatpush1.msra.mxu0 0.0
        %919 = vmatprep.subr.mxu0 0.0
        %920 = vmatpush1.msra.mxu0 0.0
        %921 = vmatprep.subr.mxu0 0.0
        %922 = vmatpush1.msra.mxu0 0.0
        %923 = vmatprep.subr.mxu0 0.0
        %924 = vmatpush1.msra.mxu0 0.0
        %925 = vmatprep.subr.mxu0 0.0
        %926 = vmatpush1.msra.mxu0 0.0
        %927 = vmatprep.subr.mxu0 0.0
        %928 = vmatpush1.msra.mxu0 0.0
        %929 = vmatprep.subr.mxu0 0.0
        %930 = vmatpush1.msra.mxu0 0.0
        %931 = vmatprep.subr.mxu0 0.0
        %932 = vmatpush1.msra.mxu0 0.0
        %933 = vmatprep.subr.mxu0 0.0
        %934 = vmatpush1.msra.mxu0 0.0
        %935 = vmatprep.subr.mxu0 0.0
        %936 = vmatpush1.msra.mxu0 0.0
        %937 = vmatprep.subr.mxu0 0.0
        %938 = vmatpush1.msra.mxu0 0.0
        %939 = vmatprep.subr.mxu0 0.0
        %940 = vmatpush1.msra.mxu0 0.0
        %941 = vmatprep.subr.mxu0 0.0
        %942 = vmatpush1.msra.mxu0 0.0
        %943 = vmatprep.subr.mxu0 0.0
        %944 = vmatpush1.msra.mxu0 0.0
        %945 = vmatprep.subr.mxu0 0.0
        %946 = vmatpush1.msra.mxu0 0.0
        %947 = vmatprep.subr.mxu0 0.0
        %948 = vmatpush1.msra.mxu0 0.0
        %949 = vmatprep.subr.mxu0 0.0
        %950 = vmatpush1.msra.mxu0 0.0
        %951 = vmatprep.subr.mxu0 0.0
        %952 = vmatpush1.msra.mxu0 0.0
        %953 = vmatprep.subr.mxu0 0.0
        %954 = vmatpush1.msra.mxu0 0.0
        %955 = vmatprep.subr.mxu0 0.0
        %956 = vmatpush1.msra.mxu0 0.0
        %957 = vmatprep.subr.mxu0 0.0
        %958 = vmatpush1.msra.mxu0 0.0
        %959 = vmatprep.subr.mxu0 0.0
        %960 = vmatpush1.msra.mxu0 0.0
        %961 = vmatprep.subr.mxu0 0.0
        %962 = vmatpush1.msra.mxu0 0.0
        %963 = vmatprep.subr.mxu0 0.0
        %964 = vmatpush1.msra.mxu0 0.0
        %965 = vmatprep.mubr.f32.mxu0 0.0
        %966 = vmatmul.mubr.f32.gmra.mrb[0].mxu0 %v896
        %v967 = vpop.f32.mrb[0].mxu0
        %v968 = vadd.f32 %v887, %v967
        %v969 = vpop.f32.mrb[0].mxu0
        %970 = vmatprep.mubr.f32.mxu0 0.0
        %971 = vmatmul.mubr.f32.gmra.mrb[0].mxu0 %v899
        %v972 = vpop.f32.mrb[0].mxu0
        %v973 = vadd.f32 %v892, %v972
        %v974 = vpop.f32.mrb[0].mxu0
        %975 = vdwg.mxu0
        %v976 = vld [vmem:[%s1] sm:$0xff]
        %v977 = vld [vmem:[%s1 + $0x8] sm:$0xff]
        %s978 = scalar_lea.vmem %s2, 16
        %v979 = vld [vmem:[%s978] sm:$0xff]
        %v980 = vld [vmem:[%s978 + $0x8] sm:$0xff]
        %s981 = scalar_lea.vmem %s2, 128
        %v982 = vld [vmem:[%s981] sm:$0xff]
        %v983 = vld [vmem:[%s981 + $0x8] sm:$0xff]
        %984 = vmatprep.subr.mxu0 0.0
        %985 = vmatpush1.msra.mxu0 %v982
        %986 = vmatprep.subr.mxu0 0.0
        %987 = vmatpush1.msra.mxu0 %v983
        %988 = vmatprep.subr.mxu0 0.0
        %989 = vmatpush1.msra.mxu0 0.0
        %990 = vmatprep.subr.mxu0 0.0
        %991 = vmatpush1.msra.mxu0 0.0
        %992 = vmatprep.subr.mxu0 0.0
        %993 = vmatpush1.msra.mxu0 0.0
        %994 = vmatprep.subr.mxu0 0.0
        %995 = vmatpush1.msra.mxu0 0.0
        %996 = vmatprep.subr.mxu0 0.0
        %997 = vmatpush1.msra.mxu0 0.0
        %998 = vmatprep.subr.mxu0 0.0
        %999 = vmatpush1.msra.mxu0 0.0
        %1000 = vmatprep.subr.mxu0 0.0
        %1001 = vmatpush1.msra.mxu0 0.0
        %1002 = vmatprep.subr.mxu0 0.0
        %1003 = vmatpush1.msra.mxu0 0.0
        %1004 = vmatprep.subr.mxu0 0.0
        %1005 = vmatpush1.msra.mxu0 0.0
        %1006 = vmatprep.subr.mxu0 0.0
        %1007 = vmatpush1.msra.mxu0 0.0
        %1008 = vmatprep.subr.mxu0 0.0
        %1009 = vmatpush1.msra.mxu0 0.0
        %1010 = vmatprep.subr.mxu0 0.0
        %1011 = vmatpush1.msra.mxu0 0.0
        %1012 = vmatprep.subr.mxu0 0.0
        %1013 = vmatpush1.msra.mxu0 0.0
        %1014 = vmatprep.subr.mxu0 0.0
        %1015 = vmatpush1.msra.mxu0 0.0
        %1016 = vmatprep.subr.mxu0 0.0
        %1017 = vmatpush1.msra.mxu0 0.0
        %1018 = vmatprep.subr.mxu0 0.0
        %1019 = vmatpush1.msra.mxu0 0.0
        %1020 = vmatprep.subr.mxu0 0.0
        %1021 = vmatpush1.msra.mxu0 0.0
        %1022 = vmatprep.subr.mxu0 0.0
        %1023 = vmatpush1.msra.mxu0 0.0
        %1024 = vmatprep.subr.mxu0 0.0
        %1025 = vmatpush1.msra.mxu0 0.0
        %1026 = vmatprep.subr.mxu0 0.0
        %1027 = vmatpush1.msra.mxu0 0.0
        %1028 = vmatprep.subr.mxu0 0.0
        %1029 = vmatpush1.msra.mxu0 0.0
        %1030 = vmatprep.subr.mxu0 0.0
        %1031 = vmatpush1.msra.mxu0 0.0
        %1032 = vmatprep.subr.mxu0 0.0
        %1033 = vmatpush1.msra.mxu0 0.0
        %1034 = vmatprep.subr.mxu0 0.0
        %1035 = vmatpush1.msra.mxu0 0.0
        %1036 = vmatprep.subr.mxu0 0.0
        %1037 = vmatpush1.msra.mxu0 0.0
        %1038 = vmatprep.subr.mxu0 0.0
        %1039 = vmatpush1.msra.mxu0 0.0
        %1040 = vmatprep.subr.mxu0 0.0
        %1041 = vmatpush1.msra.mxu0 0.0
        %1042 = vmatprep.subr.mxu0 0.0
        %1043 = vmatpush1.msra.mxu0 0.0
        %1044 = vmatprep.subr.mxu0 0.0
        %1045 = vmatpush1.msra.mxu0 0.0
        %1046 = vmatprep.subr.mxu0 0.0
        %1047 = vmatpush1.msra.mxu0 0.0
        %1048 = vmatprep.mubr.f32.mxu0 0.0
        %1049 = vmatmul.mubr.f32.gmra.mrb[0].mxu0 %v815
        %v1050 = vpop.f32.mrb[0].mxu0
        %v1051 = vadd.f32 0.0, %v1050
        %v1052 = vpop.f32.mrb[0].mxu0
        %1053 = vmatprep.mubr.f32.mxu0 0.0
        %1054 = vmatmul.mubr.f32.gmra.mrb[0].mxu0 %v818
        %v1055 = vpop.f32.mrb[0].mxu0
        %v1056 = vadd.f32 0.0, %v1055
        %v1057 = vpop.f32.mrb[0].mxu0
        %1058 = vdwg.mxu0
        %1059 = vmatprep.subr.mxu0 0.0
        %1060 = vmatpush1.msra.mxu0 %v979
        %1061 = vmatprep.subr.mxu0 0.0
        %1062 = vmatpush1.msra.mxu0 %v980
        %1063 = vmatprep.subr.mxu0 0.0
        %1064 = vmatpush1.msra.mxu0 0.0
        %1065 = vmatprep.subr.mxu0 0.0
        %1066 = vmatpush1.msra.mxu0 0.0
        %1067 = vmatprep.subr.mxu0 0.0
        %1068 = vmatpush1.msra.mxu0 0.0
        %1069 = vmatprep.subr.mxu0 0.0
        %1070 = vmatpush1.msra.mxu0 0.0
        %1071 = vmatprep.subr.mxu0 0.0
        %1072 = vmatpush1.msra.mxu0 0.0
        %1073 = vmatprep.subr.mxu0 0.0
        %1074 = vmatpush1.msra.mxu0 0.0
        %1075 = vmatprep.subr.mxu0 0.0
        %1076 = vmatpush1.msra.mxu0 0.0
        %1077 = vmatprep.subr.mxu0 0.0
        %1078 = vmatpush1.msra.mxu0 0.0
        %1079 = vmatprep.subr.mxu0 0.0
        %1080 = vmatpush1.msra.mxu0 0.0
        %1081 = vmatprep.subr.mxu0 0.0
        %1082 = vmatpush1.msra.mxu0 0.0
        %1083 = vmatprep.subr.mxu0 0.0
        %1084 = vmatpush1.msra.mxu0 0.0
        %1085 = vmatprep.subr.mxu0 0.0
        %1086 = vmatpush1.msra.mxu0 0.0
        %1087 = vmatprep.subr.mxu0 0.0
        %1088 = vmatpush1.msra.mxu0 0.0
        %1089 = vmatprep.subr.mxu0 0.0
        %1090 = vmatpush1.msra.mxu0 0.0
        %1091 = vmatprep.subr.mxu0 0.0
        %1092 = vmatpush1.msra.mxu0 0.0
        %1093 = vmatprep.subr.mxu0 0.0
        %1094 = vmatpush1.msra.mxu0 0.0
        %1095 = vmatprep.subr.mxu0 0.0
        %1096 = vmatpush1.msra.mxu0 0.0
        %1097 = vmatprep.subr.mxu0 0.0
        %1098 = vmatpush1.msra.mxu0 0.0
        %1099 = vmatprep.subr.mxu0 0.0
        %1100 = vmatpush1.msra.mxu0 0.0
        %1101 = vmatprep.subr.mxu0 0.0
        %1102 = vmatpush1.msra.mxu0 0.0
        %1103 = vmatprep.subr.mxu0 0.0
        %1104 = vmatpush1.msra.mxu0 0.0
        %1105 = vmatprep.subr.mxu0 0.0
        %1106 = vmatpush1.msra.mxu0 0.0
        %1107 = vmatprep.subr.mxu0 0.0
        %1108 = vmatpush1.msra.mxu0 0.0
        %1109 = vmatprep.subr.mxu0 0.0
        %1110 = vmatpush1.msra.mxu0 0.0
        %1111 = vmatprep.subr.mxu0 0.0
        %1112 = vmatpush1.msra.mxu0 0.0
        %1113 = vmatprep.subr.mxu0 0.0
        %1114 = vmatpush1.msra.mxu0 0.0
        %1115 = vmatprep.subr.mxu0 0.0
        %1116 = vmatpush1.msra.mxu0 0.0
        %1117 = vmatprep.subr.mxu0 0.0
        %1118 = vmatpush1.msra.mxu0 0.0
        %1119 = vmatprep.subr.mxu0 0.0
        %1120 = vmatpush1.msra.mxu0 0.0
        %1121 = vmatprep.subr.mxu0 0.0
        %1122 = vmatpush1.msra.mxu0 0.0
        %1123 = vmatprep.mubr.f32.mxu0 0.0
        %1124 = vmatmul.mubr.f32.gmra.mrb[0].mxu0 %v896
        %v1125 = vpop.f32.mrb[0].mxu0
        %v1126 = vadd.f32 %v1051, %v1125
        %v1127 = vpop.f32.mrb[0].mxu0
        %1128 = vmatprep.mubr.f32.mxu0 0.0
        %1129 = vmatmul.mubr.f32.gmra.mrb[0].mxu0 %v899
        %v1130 = vpop.f32.mrb[0].mxu0
        %v1131 = vadd.f32 %v1056, %v1130
        %v1132 = vpop.f32.mrb[0].mxu0
        %1133 = vdwg.mxu0
        %s1134 = scalar_lea.vmem %s1, 16
        %v1135 = vld [vmem:[%s1134] sm:$0xff]
        %v1136 = vld [vmem:[%s1134 + $0x8] sm:$0xff]
        %v1138 = vsel %vm297, %v1135, 0
        %v1141 = vsel %vm297, %v1136, 0
        %1143 = vmatprep.subr.mxu0 0.0
        %1144 = vmatpush1.msra.mxu0 %v1126
        %1145 = vmatprep.subr.mxu0 0.0
        %1146 = vmatpush1.msra.mxu0 %v1131
        %1147 = vmatprep.subr.mxu0 0.0
        %1148 = vmatpush1.msra.mxu0 0.0
        %1149 = vmatprep.subr.mxu0 0.0
        %1150 = vmatpush1.msra.mxu0 0.0
        %1151 = vmatprep.subr.mxu0 0.0
        %1152 = vmatpush1.msra.mxu0 0.0
        %1153 = vmatprep.subr.mxu0 0.0
        %1154 = vmatpush1.msra.mxu0 0.0
        %1155 = vmatprep.subr.mxu0 0.0
        %1156 = vmatpush1.msra.mxu0 0.0
        %1157 = vmatprep.subr.mxu0 0.0
        %1158 = vmatpush1.msra.mxu0 0.0
        %1159 = vmatprep.subr.mxu0 0.0
        %1160 = vmatpush1.msra.mxu0 0.0
        %1161 = vmatprep.subr.mxu0 0.0
        %1162 = vmatpush1.msra.mxu0 0.0
        %1163 = vmatprep.subr.mxu0 0.0
        %1164 = vmatpush1.msra.mxu0 0.0
        %1165 = vmatprep.subr.mxu0 0.0
        %1166 = vmatpush1.msra.mxu0 0.0
        %1167 = vmatprep.subr.mxu0 0.0
        %1168 = vmatpush1.msra.mxu0 0.0
        %1169 = vmatprep.subr.mxu0 0.0
        %1170 = vmatpush1.msra.mxu0 0.0
        %1171 = vmatprep.subr.mxu0 0.0
        %1172 = vmatpush1.msra.mxu0 0.0
        %1173 = vmatprep.subr.mxu0 0.0
        %1174 = vmatpush1.msra.mxu0 0.0
        %1175 = vmatprep.subr.mxu0 0.0
        %1176 = vmatpush1.msra.mxu0 0.0
        %1177 = vmatprep.subr.mxu0 0.0
        %1178 = vmatpush1.msra.mxu0 0.0
        %1179 = vmatprep.subr.mxu0 0.0
        %1180 = vmatpush1.msra.mxu0 0.0
        %1181 = vmatprep.subr.mxu0 0.0
        %1182 = vmatpush1.msra.mxu0 0.0
        %1183 = vmatprep.subr.mxu0 0.0
        %1184 = vmatpush1.msra.mxu0 0.0
        %1185 = vmatprep.subr.mxu0 0.0
        %1186 = vmatpush1.msra.mxu0 0.0
        %1187 = vmatprep.subr.mxu0 0.0
        %1188 = vmatpush1.msra.mxu0 0.0
        %1189 = vmatprep.subr.mxu0 0.0
        %1190 = vmatpush1.msra.mxu0 0.0
        %1191 = vmatprep.subr.mxu0 0.0
        %1192 = vmatpush1.msra.mxu0 0.0
        %1193 = vmatprep.subr.mxu0 0.0
        %1194 = vmatpush1.msra.mxu0 0.0
        %1195 = vmatprep.subr.mxu0 0.0
        %1196 = vmatpush1.msra.mxu0 0.0
        %1197 = vmatprep.subr.mxu0 0.0
        %1198 = vmatpush1.msra.mxu0 0.0
        %1199 = vmatprep.subr.mxu0 0.0
        %1200 = vmatpush1.msra.mxu0 0.0
        %1201 = vmatprep.subr.mxu0 0.0
        %1202 = vmatpush1.msra.mxu0 0.0
        %1203 = vmatprep.subr.mxu0 0.0
        %1204 = vmatpush1.msra.mxu0 0.0
        %1205 = vmatprep.subr.mxu0 0.0
        %1206 = vmatpush1.msra.mxu0 0.0
        %1207 = vmatprep.mubr.f32.mxu0 0.0
        %1208 = vmatmul.mubr.f32.gmra.mrb[0].mxu0 %v1138
        %v1209 = vpop.f32.mrb[0].mxu0
        %v1210 = vadd.f32 0.0, %v1209
        %v1211 = vpop.f32.mrb[0].mxu0
        %1212 = vmatprep.mubr.f32.mxu0 0.0
        %1213 = vmatmul.mubr.f32.gmra.mrb[0].mxu0 %v1141
        %v1214 = vpop.f32.mrb[0].mxu0
        %v1215 = vadd.f32 0.0, %v1214
        %v1216 = vpop.f32.mrb[0].mxu0
        %1217 = vdwg.mxu0
        %v1219 = vsel %vm297, %v976, 0
        %v1222 = vsel %vm297, %v977, 0
        %1224 = vmatprep.subr.mxu0 0.0
        %1225 = vmatpush1.msra.mxu0 %v968
        %1226 = vmatprep.subr.mxu0 0.0
        %1227 = vmatpush1.msra.mxu0 %v973
        %1228 = vmatprep.subr.mxu0 0.0
        %1229 = vmatpush1.msra.mxu0 0.0
        %1230 = vmatprep.subr.mxu0 0.0
        %1231 = vmatpush1.msra.mxu0 0.0
        %1232 = vmatprep.subr.mxu0 0.0
        %1233 = vmatpush1.msra.mxu0 0.0
        %1234 = vmatprep.subr.mxu0 0.0
        %1235 = vmatpush1.msra.mxu0 0.0
        %1236 = vmatprep.subr.mxu0 0.0
        %1237 = vmatpush1.msra.mxu0 0.0
        %1238 = vmatprep.subr.mxu0 0.0
        %1239 = vmatpush1.msra.mxu0 0.0
        %1240 = vmatprep.subr.mxu0 0.0
        %1241 = vmatpush1.msra.mxu0 0.0
        %1242 = vmatprep.subr.mxu0 0.0
        %1243 = vmatpush1.msra.mxu0 0.0
        %1244 = vmatprep.subr.mxu0 0.0
        %1245 = vmatpush1.msra.mxu0 0.0
        %1246 = vmatprep.subr.mxu0 0.0
        %1247 = vmatpush1.msra.mxu0 0.0
        %1248 = vmatprep.subr.mxu0 0.0
        %1249 = vmatpush1.msra.mxu0 0.0
        %1250 = vmatprep.subr.mxu0 0.0
        %1251 = vmatpush1.msra.mxu0 0.0
        %1252 = vmatprep.subr.mxu0 0.0
        %1253 = vmatpush1.msra.mxu0 0.0
        %1254 = vmatprep.subr.mxu0 0.0
        %1255 = vmatpush1.msra.mxu0 0.0
        %1256 = vmatprep.subr.mxu0 0.0
        %1257 = vmatpush1.msra.mxu0 0.0
        %1258 = vmatprep.subr.mxu0 0.0
        %1259 = vmatpush1.msra.mxu0 0.0
        %1260 = vmatprep.subr.mxu0 0.0
        %1261 = vmatpush1.msra.mxu0 0.0
        %1262 = vmatprep.subr.mxu0 0.0
        %1263 = vmatpush1.msra.mxu0 0.0
        %1264 = vmatprep.subr.mxu0 0.0
        %1265 = vmatpush1.msra.mxu0 0.0
        %1266 = vmatprep.subr.mxu0 0.0
        %1267 = vmatpush1.msra.mxu0 0.0
        %1268 = vmatprep.subr.mxu0 0.0
        %1269 = vmatpush1.msra.mxu0 0.0
        %1270 = vmatprep.subr.mxu0 0.0
        %1271 = vmatpush1.msra.mxu0 0.0
        %1272 = vmatprep.subr.mxu0 0.0
        %1273 = vmatpush1.msra.mxu0 0.0
        %1274 = vmatprep.subr.mxu0 0.0
        %1275 = vmatpush1.msra.mxu0 0.0
        %1276 = vmatprep.subr.mxu0 0.0
        %1277 = vmatpush1.msra.mxu0 0.0
        %1278 = vmatprep.subr.mxu0 0.0
        %1279 = vmatpush1.msra.mxu0 0.0
        %1280 = vmatprep.subr.mxu0 0.0
        %1281 = vmatpush1.msra.mxu0 0.0
        %1282 = vmatprep.subr.mxu0 0.0
        %1283 = vmatpush1.msra.mxu0 0.0
        %1284 = vmatprep.subr.mxu0 0.0
        %1285 = vmatpush1.msra.mxu0 0.0
        %1286 = vmatprep.subr.mxu0 0.0
        %1287 = vmatpush1.msra.mxu0 0.0
        %1288 = vmatprep.mubr.f32.mxu0 0.0
        %1289 = vmatmul.mubr.f32.gmra.mrb[0].mxu0 %v1219
        %v1290 = vpop.f32.mrb[0].mxu0
        %v1291 = vadd.f32 %v1210, %v1290
        %v1292 = vpop.f32.mrb[0].mxu0
        %1293 = vmatprep.mubr.f32.mxu0 0.0
        %1294 = vmatmul.mubr.f32.gmra.mrb[0].mxu0 %v1222
        %v1295 = vpop.f32.mrb[0].mxu0
        %v1296 = vadd.f32 %v1215, %v1295
        %v1297 = vpop.f32.mrb[0].mxu0
        %1298 = vdwg.mxu0
        %s1299 = scalar_lea.vmem %s2, 32
        %v1300 = vld [vmem:[%s1299] sm:$0xff]
        %v1301 = vld [vmem:[%s1299 + $0x8] sm:$0xff]
        %s1302 = scalar_lea.vmem %s2, 144
        %v1303 = vld [vmem:[%s1302] sm:$0xff]
        %v1304 = vld [vmem:[%s1302 + $0x8] sm:$0xff]
        %1305 = vmatprep.subr.mxu0 0.0
        %1306 = vmatpush1.msra.mxu0 %v1303
        %1307 = vmatprep.subr.mxu0 0.0
        %1308 = vmatpush1.msra.mxu0 %v1304
        %1309 = vmatprep.subr.mxu0 0.0
        %1310 = vmatpush1.msra.mxu0 0.0
        %1311 = vmatprep.subr.mxu0 0.0
        %1312 = vmatpush1.msra.mxu0 0.0
        %1313 = vmatprep.subr.mxu0 0.0
        %1314 = vmatpush1.msra.mxu0 0.0
        %1315 = vmatprep.subr.mxu0 0.0
        %1316 = vmatpush1.msra.mxu0 0.0
        %1317 = vmatprep.subr.mxu0 0.0
        %1318 = vmatpush1.msra.mxu0 0.0
        %1319 = vmatprep.subr.mxu0 0.0
        %1320 = vmatpush1.msra.mxu0 0.0
        %1321 = vmatprep.subr.mxu0 0.0
        %1322 = vmatpush1.msra.mxu0 0.0
        %1323 = vmatprep.subr.mxu0 0.0
        %1324 = vmatpush1.msra.mxu0 0.0
        %1325 = vmatprep.subr.mxu0 0.0
        %1326 = vmatpush1.msra.mxu0 0.0
        %1327 = vmatprep.subr.mxu0 0.0
        %1328 = vmatpush1.msra.mxu0 0.0
        %1329 = vmatprep.subr.mxu0 0.0
        %1330 = vmatpush1.msra.mxu0 0.0
        %1331 = vmatprep.subr.mxu0 0.0
        %1332 = vmatpush1.msra.mxu0 0.0
        %1333 = vmatprep.subr.mxu0 0.0
        %1334 = vmatpush1.msra.mxu0 0.0
        %1335 = vmatprep.subr.mxu0 0.0
        %1336 = vmatpush1.msra.mxu0 0.0
        %1337 = vmatprep.subr.mxu0 0.0
        %1338 = vmatpush1.msra.mxu0 0.0
        %1339 = vmatprep.subr.mxu0 0.0
        %1340 = vmatpush1.msra.mxu0 0.0
        %1341 = vmatprep.subr.mxu0 0.0
        %1342 = vmatpush1.msra.mxu0 0.0
        %1343 = vmatprep.subr.mxu0 0.0
        %1344 = vmatpush1.msra.mxu0 0.0
        %1345 = vmatprep.subr.mxu0 0.0
        %1346 = vmatpush1.msra.mxu0 0.0
        %1347 = vmatprep.subr.mxu0 0.0
        %1348 = vmatpush1.msra.mxu0 0.0
        %1349 = vmatprep.subr.mxu0 0.0
        %1350 = vmatpush1.msra.mxu0 0.0
        %1351 = vmatprep.subr.mxu0 0.0
        %1352 = vmatpush1.msra.mxu0 0.0
        %1353 = vmatprep.subr.mxu0 0.0
        %1354 = vmatpush1.msra.mxu0 0.0
        %1355 = vmatprep.subr.mxu0 0.0
        %1356 = vmatpush1.msra.mxu0 0.0
        %1357 = vmatprep.subr.mxu0 0.0
        %1358 = vmatpush1.msra.mxu0 0.0
        %1359 = vmatprep.subr.mxu0 0.0
        %1360 = vmatpush1.msra.mxu0 0.0
        %1361 = vmatprep.subr.mxu0 0.0
        %1362 = vmatpush1.msra.mxu0 0.0
        %1363 = vmatprep.subr.mxu0 0.0
        %1364 = vmatpush1.msra.mxu0 0.0
        %1365 = vmatprep.subr.mxu0 0.0
        %1366 = vmatpush1.msra.mxu0 0.0
        %1367 = vmatprep.subr.mxu0 0.0
        %1368 = vmatpush1.msra.mxu0 0.0
        %1369 = vmatprep.mubr.f32.mxu0 0.0
        %1370 = vmatmul.mubr.f32.gmra.mrb[0].mxu0 %v815
        %v1371 = vpop.f32.mrb[0].mxu0
        %v1372 = vadd.f32 0.0, %v1371
        %v1373 = vpop.f32.mrb[0].mxu0
        %1374 = vmatprep.mubr.f32.mxu0 0.0
        %1375 = vmatmul.mubr.f32.gmra.mrb[0].mxu0 %v818
        %v1376 = vpop.f32.mrb[0].mxu0
        %v1377 = vadd.f32 0.0, %v1376
        %v1378 = vpop.f32.mrb[0].mxu0
        %1379 = vdwg.mxu0
        %1380 = vmatprep.subr.mxu0 0.0
        %1381 = vmatpush1.msra.mxu0 %v1300
        %1382 = vmatprep.subr.mxu0 0.0
        %1383 = vmatpush1.msra.mxu0 %v1301
        %1384 = vmatprep.subr.mxu0 0.0
        %1385 = vmatpush1.msra.mxu0 0.0
        %1386 = vmatprep.subr.mxu0 0.0
        %1387 = vmatpush1.msra.mxu0 0.0
        %1388 = vmatprep.subr.mxu0 0.0
        %1389 = vmatpush1.msra.mxu0 0.0
        %1390 = vmatprep.subr.mxu0 0.0
        %1391 = vmatpush1.msra.mxu0 0.0
        %1392 = vmatprep.subr.mxu0 0.0
        %1393 = vmatpush1.msra.mxu0 0.0
        %1394 = vmatprep.subr.mxu0 0.0
        %1395 = vmatpush1.msra.mxu0 0.0
        %1396 = vmatprep.subr.mxu0 0.0
        %1397 = vmatpush1.msra.mxu0 0.0
        %1398 = vmatprep.subr.mxu0 0.0
        %1399 = vmatpush1.msra.mxu0 0.0
        %1400 = vmatprep.subr.mxu0 0.0
        %1401 = vmatpush1.msra.mxu0 0.0
        %1402 = vmatprep.subr.mxu0 0.0
        %1403 = vmatpush1.msra.mxu0 0.0
        %1404 = vmatprep.subr.mxu0 0.0
        %1405 = vmatpush1.msra.mxu0 0.0
        %1406 = vmatprep.subr.mxu0 0.0
        %1407 = vmatpush1.msra.mxu0 0.0
        %1408 = vmatprep.subr.mxu0 0.0
        %1409 = vmatpush1.msra.mxu0 0.0
        %1410 = vmatprep.subr.mxu0 0.0
        %1411 = vmatpush1.msra.mxu0 0.0
        %1412 = vmatprep.subr.mxu0 0.0
        %1413 = vmatpush1.msra.mxu0 0.0
        %1414 = vmatprep.subr.mxu0 0.0
        %1415 = vmatpush1.msra.mxu0 0.0
        %1416 = vmatprep.subr.mxu0 0.0
        %1417 = vmatpush1.msra.mxu0 0.0
        %1418 = vmatprep.subr.mxu0 0.0
        %1419 = vmatpush1.msra.mxu0 0.0
        %1420 = vmatprep.subr.mxu0 0.0
        %1421 = vmatpush1.msra.mxu0 0.0
        %1422 = vmatprep.subr.mxu0 0.0
        %1423 = vmatpush1.msra.mxu0 0.0
        %1424 = vmatprep.subr.mxu0 0.0
        %1425 = vmatpush1.msra.mxu0 0.0
        %1426 = vmatprep.subr.mxu0 0.0
        %1427 = vmatpush1.msra.mxu0 0.0
        %1428 = vmatprep.subr.mxu0 0.0
        %1429 = vmatpush1.msra.mxu0 0.0
        %1430 = vmatprep.subr.mxu0 0.0
        %1431 = vmatpush1.msra.mxu0 0.0
        %1432 = vmatprep.subr.mxu0 0.0
        %1433 = vmatpush1.msra.mxu0 0.0
        %1434 = vmatprep.subr.mxu0 0.0
        %1435 = vmatpush1.msra.mxu0 0.0
        %1436 = vmatprep.subr.mxu0 0.0
        %1437 = vmatpush1.msra.mxu0 0.0
        %1438 = vmatprep.subr.mxu0 0.0
        %1439 = vmatpush1.msra.mxu0 0.0
        %1440 = vmatprep.subr.mxu0 0.0
        %1441 = vmatpush1.msra.mxu0 0.0
        %1442 = vmatprep.subr.mxu0 0.0
        %1443 = vmatpush1.msra.mxu0 0.0
        %1444 = vmatprep.mubr.f32.mxu0 0.0
        %1445 = vmatmul.mubr.f32.gmra.mrb[0].mxu0 %v896
        %v1446 = vpop.f32.mrb[0].mxu0
        %v1447 = vadd.f32 %v1372, %v1446
        %v1448 = vpop.f32.mrb[0].mxu0
        %1449 = vmatprep.mubr.f32.mxu0 0.0
        %1450 = vmatmul.mubr.f32.gmra.mrb[0].mxu0 %v899
        %v1451 = vpop.f32.mrb[0].mxu0
        %v1452 = vadd.f32 %v1377, %v1451
        %v1453 = vpop.f32.mrb[0].mxu0
        %1454 = vdwg.mxu0
        %s1455 = scalar_lea.vmem %s1, 32
        %v1456 = vld [vmem:[%s1455] sm:$0xff]
        %v1457 = vld [vmem:[%s1455 + $0x8] sm:$0xff]
        %v1459 = vsel %vm297, %v1456, 0
        %v1462 = vsel %vm297, %v1457, 0
        %1464 = vmatprep.subr.mxu0 0.0
        %1465 = vmatpush1.msra.mxu0 %v1447
        %1466 = vmatprep.subr.mxu0 0.0
        %1467 = vmatpush1.msra.mxu0 %v1452
        %1468 = vmatprep.subr.mxu0 0.0
        %1469 = vmatpush1.msra.mxu0 0.0
        %1470 = vmatprep.subr.mxu0 0.0
        %1471 = vmatpush1.msra.mxu0 0.0
        %1472 = vmatprep.subr.mxu0 0.0
        %1473 = vmatpush1.msra.mxu0 0.0
        %1474 = vmatprep.subr.mxu0 0.0
        %1475 = vmatpush1.msra.mxu0 0.0
        %1476 = vmatprep.subr.mxu0 0.0
        %1477 = vmatpush1.msra.mxu0 0.0
        %1478 = vmatprep.subr.mxu0 0.0
        %1479 = vmatpush1.msra.mxu0 0.0
        %1480 = vmatprep.subr.mxu0 0.0
        %1481 = vmatpush1.msra.mxu0 0.0
        %1482 = vmatprep.subr.mxu0 0.0
        %1483 = vmatpush1.msra.mxu0 0.0
        %1484 = vmatprep.subr.mxu0 0.0
        %1485 = vmatpush1.msra.mxu0 0.0
        %1486 = vmatprep.subr.mxu0 0.0
        %1487 = vmatpush1.msra.mxu0 0.0
        %1488 = vmatprep.subr.mxu0 0.0
        %1489 = vmatpush1.msra.mxu0 0.0
        %1490 = vmatprep.subr.mxu0 0.0
        %1491 = vmatpush1.msra.mxu0 0.0
        %1492 = vmatprep.subr.mxu0 0.0
        %1493 = vmatpush1.msra.mxu0 0.0
        %1494 = vmatprep.subr.mxu0 0.0
        %1495 = vmatpush1.msra.mxu0 0.0
        %1496 = vmatprep.subr.mxu0 0.0
        %1497 = vmatpush1.msra.mxu0 0.0
        %1498 = vmatprep.subr.mxu0 0.0
        %1499 = vmatpush1.msra.mxu0 0.0
        %1500 = vmatprep.subr.mxu0 0.0
        %1501 = vmatpush1.msra.mxu0 0.0
        %1502 = vmatprep.subr.mxu0 0.0
        %1503 = vmatpush1.msra.mxu0 0.0
        %1504 = vmatprep.subr.mxu0 0.0
        %1505 = vmatpush1.msra.mxu0 0.0
        %1506 = vmatprep.subr.mxu0 0.0
        %1507 = vmatpush1.msra.mxu0 0.0
        %1508 = vmatprep.subr.mxu0 0.0
        %1509 = vmatpush1.msra.mxu0 0.0
        %1510 = vmatprep.subr.mxu0 0.0
        %1511 = vmatpush1.msra.mxu0 0.0
        %1512 = vmatprep.subr.mxu0 0.0
        %1513 = vmatpush1.msra.mxu0 0.0
        %1514 = vmatprep.subr.mxu0 0.0
        %1515 = vmatpush1.msra.mxu0 0.0
        %1516 = vmatprep.subr.mxu0 0.0
        %1517 = vmatpush1.msra.mxu0 0.0
        %1518 = vmatprep.subr.mxu0 0.0
        %1519 = vmatpush1.msra.mxu0 0.0
        %1520 = vmatprep.subr.mxu0 0.0
        %1521 = vmatpush1.msra.mxu0 0.0
        %1522 = vmatprep.subr.mxu0 0.0
        %1523 = vmatpush1.msra.mxu0 0.0
        %1524 = vmatprep.subr.mxu0 0.0
        %1525 = vmatpush1.msra.mxu0 0.0
        %1526 = vmatprep.subr.mxu0 0.0
        %1527 = vmatpush1.msra.mxu0 0.0
        %1528 = vmatprep.mubr.f32.mxu0 0.0
        %1529 = vmatmul.mubr.f32.gmra.mrb[0].mxu0 %v1459
        %v1530 = vpop.f32.mrb[0].mxu0
        %v1531 = vadd.f32 0.0, %v1530
        %v1532 = vpop.f32.mrb[0].mxu0
        %1533 = vmatprep.mubr.f32.mxu0 0.0
        %1534 = vmatmul.mubr.f32.gmra.mrb[0].mxu0 %v1462
        %v1535 = vpop.f32.mrb[0].mxu0
        %v1536 = vadd.f32 0.0, %v1535
        %v1537 = vpop.f32.mrb[0].mxu0
        %1538 = vdwg.mxu0
        %v1539 = vadd.f32 %v1291, %v1531
        %v1540 = vadd.f32 %v1296, %v1536
        %s1541 = scalar_lea.vmem %s2, 48
        %v1542 = vld [vmem:[%s1541] sm:$0xff]
        %v1543 = vld [vmem:[%s1541 + $0x8] sm:$0xff]
        %s1544 = scalar_lea.vmem %s2, 160
        %v1545 = vld [vmem:[%s1544] sm:$0xff]
        %v1546 = vld [vmem:[%s1544 + $0x8] sm:$0xff]
        %1547 = vmatprep.subr.mxu0 0.0
        %1548 = vmatpush1.msra.mxu0 %v1545
        %1549 = vmatprep.subr.mxu0 0.0
        %1550 = vmatpush1.msra.mxu0 %v1546
        %1551 = vmatprep.subr.mxu0 0.0
        %1552 = vmatpush1.msra.mxu0 0.0
        %1553 = vmatprep.subr.mxu0 0.0
        %1554 = vmatpush1.msra.mxu0 0.0
        %1555 = vmatprep.subr.mxu0 0.0
        %1556 = vmatpush1.msra.mxu0 0.0
        %1557 = vmatprep.subr.mxu0 0.0
        %1558 = vmatpush1.msra.mxu0 0.0
        %1559 = vmatprep.subr.mxu0 0.0
        %1560 = vmatpush1.msra.mxu0 0.0
        %1561 = vmatprep.subr.mxu0 0.0
        %1562 = vmatpush1.msra.mxu0 0.0
        %1563 = vmatprep.subr.mxu0 0.0
        %1564 = vmatpush1.msra.mxu0 0.0
        %1565 = vmatprep.subr.mxu0 0.0
        %1566 = vmatpush1.msra.mxu0 0.0
        %1567 = vmatprep.subr.mxu0 0.0
        %1568 = vmatpush1.msra.mxu0 0.0
        %1569 = vmatprep.subr.mxu0 0.0
        %1570 = vmatpush1.msra.mxu0 0.0
        %1571 = vmatprep.subr.mxu0 0.0
        %1572 = vmatpush1.msra.mxu0 0.0
        %1573 = vmatprep.subr.mxu0 0.0
        %1574 = vmatpush1.msra.mxu0 0.0
        %1575 = vmatprep.subr.mxu0 0.0
        %1576 = vmatpush1.msra.mxu0 0.0
        %1577 = vmatprep.subr.mxu0 0.0
        %1578 = vmatpush1.msra.mxu0 0.0
        %1579 = vmatprep.subr.mxu0 0.0
        %1580 = vmatpush1.msra.mxu0 0.0
        %1581 = vmatprep.subr.mxu0 0.0
        %1582 = vmatpush1.msra.mxu0 0.0
        %1583 = vmatprep.subr.mxu0 0.0
        %1584 = vmatpush1.msra.mxu0 0.0
        %1585 = vmatprep.subr.mxu0 0.0
        %1586 = vmatpush1.msra.mxu0 0.0
        %1587 = vmatprep.subr.mxu0 0.0
        %1588 = vmatpush1.msra.mxu0 0.0
        %1589 = vmatprep.subr.mxu0 0.0
        %1590 = vmatpush1.msra.mxu0 0.0
        %1591 = vmatprep.subr.mxu0 0.0
        %1592 = vmatpush1.msra.mxu0 0.0
        %1593 = vmatprep.subr.mxu0 0.0
        %1594 = vmatpush1.msra.mxu0 0.0
        %1595 = vmatprep.subr.mxu0 0.0
        %1596 = vmatpush1.msra.mxu0 0.0
        %1597 = vmatprep.subr.mxu0 0.0
        %1598 = vmatpush1.msra.mxu0 0.0
        %1599 = vmatprep.subr.mxu0 0.0
        %1600 = vmatpush1.msra.mxu0 0.0
        %1601 = vmatprep.subr.mxu0 0.0
        %1602 = vmatpush1.msra.mxu0 0.0
        %1603 = vmatprep.subr.mxu0 0.0
        %1604 = vmatpush1.msra.mxu0 0.0
        %1605 = vmatprep.subr.mxu0 0.0
        %1606 = vmatpush1.msra.mxu0 0.0
        %1607 = vmatprep.subr.mxu0 0.0
        %1608 = vmatpush1.msra.mxu0 0.0
        %1609 = vmatprep.subr.mxu0 0.0
        %1610 = vmatpush1.msra.mxu0 0.0
        %1611 = vmatprep.mubr.f32.mxu0 0.0
        %1612 = vmatmul.mubr.f32.gmra.mrb[0].mxu0 %v815
        %v1613 = vpop.f32.mrb[0].mxu0
        %v1614 = vadd.f32 0.0, %v1613
        %v1615 = vpop.f32.mrb[0].mxu0
        %1616 = vmatprep.mubr.f32.mxu0 0.0
        %1617 = vmatmul.mubr.f32.gmra.mrb[0].mxu0 %v818
        %v1618 = vpop.f32.mrb[0].mxu0
        %v1619 = vadd.f32 0.0, %v1618
        %v1620 = vpop.f32.mrb[0].mxu0
        %1621 = vdwg.mxu0
        %1622 = vmatprep.subr.mxu0 0.0
        %1623 = vmatpush1.msra.mxu0 %v1542
        %1624 = vmatprep.subr.mxu0 0.0
        %1625 = vmatpush1.msra.mxu0 %v1543
        %1626 = vmatprep.subr.mxu0 0.0
        %1627 = vmatpush1.msra.mxu0 0.0
        %1628 = vmatprep.subr.mxu0 0.0
        %1629 = vmatpush1.msra.mxu0 0.0
        %1630 = vmatprep.subr.mxu0 0.0
        %1631 = vmatpush1.msra.mxu0 0.0
        %1632 = vmatprep.subr.mxu0 0.0
        %1633 = vmatpush1.msra.mxu0 0.0
        %1634 = vmatprep.subr.mxu0 0.0
        %1635 = vmatpush1.msra.mxu0 0.0
        %1636 = vmatprep.subr.mxu0 0.0
        %1637 = vmatpush1.msra.mxu0 0.0
        %1638 = vmatprep.subr.mxu0 0.0
        %1639 = vmatpush1.msra.mxu0 0.0
        %1640 = vmatprep.subr.mxu0 0.0
        %1641 = vmatpush1.msra.mxu0 0.0
        %1642 = vmatprep.subr.mxu0 0.0
        %1643 = vmatpush1.msra.mxu0 0.0
        %1644 = vmatprep.subr.mxu0 0.0
        %1645 = vmatpush1.msra.mxu0 0.0
        %1646 = vmatprep.subr.mxu0 0.0
        %1647 = vmatpush1.msra.mxu0 0.0
        %1648 = vmatprep.subr.mxu0 0.0
        %1649 = vmatpush1.msra.mxu0 0.0
        %1650 = vmatprep.subr.mxu0 0.0
        %1651 = vmatpush1.msra.mxu0 0.0
        %1652 = vmatprep.subr.mxu0 0.0
        %1653 = vmatpush1.msra.mxu0 0.0
        %1654 = vmatprep.subr.mxu0 0.0
        %1655 = vmatpush1.msra.mxu0 0.0
        %1656 = vmatprep.subr.mxu0 0.0
        %1657 = vmatpush1.msra.mxu0 0.0
        %1658 = vmatprep.subr.mxu0 0.0
        %1659 = vmatpush1.msra.mxu0 0.0
        %1660 = vmatprep.subr.mxu0 0.0
        %1661 = vmatpush1.msra.mxu0 0.0
        %1662 = vmatprep.subr.mxu0 0.0
        %1663 = vmatpush1.msra.mxu0 0.0
        %1664 = vmatprep.subr.mxu0 0.0
        %1665 = vmatpush1.msra.mxu0 0.0
        %1666 = vmatprep.subr.mxu0 0.0
        %1667 = vmatpush1.msra.mxu0 0.0
        %1668 = vmatprep.subr.mxu0 0.0
        %1669 = vmatpush1.msra.mxu0 0.0
        %1670 = vmatprep.subr.mxu0 0.0
        %1671 = vmatpush1.msra.mxu0 0.0
        %1672 = vmatprep.subr.mxu0 0.0
        %1673 = vmatpush1.msra.mxu0 0.0
        %1674 = vmatprep.subr.mxu0 0.0
        %1675 = vmatpush1.msra.mxu0 0.0
        %1676 = vmatprep.subr.mxu0 0.0
        %1677 = vmatpush1.msra.mxu0 0.0
        %1678 = vmatprep.subr.mxu0 0.0
        %1679 = vmatpush1.msra.mxu0 0.0
        %1680 = vmatprep.subr.mxu0 0.0
        %1681 = vmatpush1.msra.mxu0 0.0
        %1682 = vmatprep.subr.mxu0 0.0
        %1683 = vmatpush1.msra.mxu0 0.0
        %1684 = vmatprep.subr.mxu0 0.0
        %1685 = vmatpush1.msra.mxu0 0.0
        %1686 = vmatprep.mubr.f32.mxu0 0.0
        %1687 = vmatmul.mubr.f32.gmra.mrb[0].mxu0 %v896
        %v1688 = vpop.f32.mrb[0].mxu0
        %v1689 = vadd.f32 %v1614, %v1688
        %v1690 = vpop.f32.mrb[0].mxu0
        %1691 = vmatprep.mubr.f32.mxu0 0.0
        %1692 = vmatmul.mubr.f32.gmra.mrb[0].mxu0 %v899
        %v1693 = vpop.f32.mrb[0].mxu0
        %v1694 = vadd.f32 %v1619, %v1693
        %v1695 = vpop.f32.mrb[0].mxu0
        %1696 = vdwg.mxu0
        %s1697 = scalar_lea.vmem %s1, 48
        %v1698 = vld [vmem:[%s1697] sm:$0xff]
        %v1699 = vld [vmem:[%s1697 + $0x8] sm:$0xff]
        %v1701 = vsel %vm297, %v1698, 0
        %v1704 = vsel %vm297, %v1699, 0
        %1706 = vmatprep.subr.mxu0 0.0
        %1707 = vmatpush1.msra.mxu0 %v1689
        %1708 = vmatprep.subr.mxu0 0.0
        %1709 = vmatpush1.msra.mxu0 %v1694
        %1710 = vmatprep.subr.mxu0 0.0
        %1711 = vmatpush1.msra.mxu0 0.0
        %1712 = vmatprep.subr.mxu0 0.0
        %1713 = vmatpush1.msra.mxu0 0.0
        %1714 = vmatprep.subr.mxu0 0.0
        %1715 = vmatpush1.msra.mxu0 0.0
        %1716 = vmatprep.subr.mxu0 0.0
        %1717 = vmatpush1.msra.mxu0 0.0
        %1718 = vmatprep.subr.mxu0 0.0
        %1719 = vmatpush1.msra.mxu0 0.0
        %1720 = vmatprep.subr.mxu0 0.0
        %1721 = vmatpush1.msra.mxu0 0.0
        %1722 = vmatprep.subr.mxu0 0.0
        %1723 = vmatpush1.msra.mxu0 0.0
        %1724 = vmatprep.subr.mxu0 0.0
        %1725 = vmatpush1.msra.mxu0 0.0
        %1726 = vmatprep.subr.mxu0 0.0
        %1727 = vmatpush1.msra.mxu0 0.0
        %1728 = vmatprep.subr.mxu0 0.0
        %1729 = vmatpush1.msra.mxu0 0.0
        %1730 = vmatprep.subr.mxu0 0.0
        %1731 = vmatpush1.msra.mxu0 0.0
        %1732 = vmatprep.subr.mxu0 0.0
        %1733 = vmatpush1.msra.mxu0 0.0
        %1734 = vmatprep.subr.mxu0 0.0
        %1735 = vmatpush1.msra.mxu0 0.0
        %1736 = vmatprep.subr.mxu0 0.0
        %1737 = vmatpush1.msra.mxu0 0.0
        %1738 = vmatprep.subr.mxu0 0.0
        %1739 = vmatpush1.msra.mxu0 0.0
        %1740 = vmatprep.subr.mxu0 0.0
        %1741 = vmatpush1.msra.mxu0 0.0
        %1742 = vmatprep.subr.mxu0 0.0
        %1743 = vmatpush1.msra.mxu0 0.0
        %1744 = vmatprep.subr.mxu0 0.0
        %1745 = vmatpush1.msra.mxu0 0.0
        %1746 = vmatprep.subr.mxu0 0.0
        %1747 = vmatpush1.msra.mxu0 0.0
        %1748 = vmatprep.subr.mxu0 0.0
        %1749 = vmatpush1.msra.mxu0 0.0
        %1750 = vmatprep.subr.mxu0 0.0
        %1751 = vmatpush1.msra.mxu0 0.0
        %1752 = vmatprep.subr.mxu0 0.0
        %1753 = vmatpush1.msra.mxu0 0.0
        %1754 = vmatprep.subr.mxu0 0.0
        %1755 = vmatpush1.msra.mxu0 0.0
        %1756 = vmatprep.subr.mxu0 0.0
        %1757 = vmatpush1.msra.mxu0 0.0
        %1758 = vmatprep.subr.mxu0 0.0
        %1759 = vmatpush1.msra.mxu0 0.0
        %1760 = vmatprep.subr.mxu0 0.0
        %1761 = vmatpush1.msra.mxu0 0.0
        %1762 = vmatprep.subr.mxu0 0.0
        %1763 = vmatpush1.msra.mxu0 0.0
        %1764 = vmatprep.subr.mxu0 0.0
        %1765 = vmatpush1.msra.mxu0 0.0
        %1766 = vmatprep.subr.mxu0 0.0
        %1767 = vmatpush1.msra.mxu0 0.0
        %1768 = vmatprep.subr.mxu0 0.0
        %1769 = vmatpush1.msra.mxu0 0.0
        %1770 = vmatprep.mubr.f32.mxu0 0.0
        %1771 = vmatmul.mubr.f32.gmra.mrb[0].mxu0 %v1701
        %v1772 = vpop.f32.mrb[0].mxu0
        %v1773 = vadd.f32 0.0, %v1772
        %v1774 = vpop.f32.mrb[0].mxu0
        %1775 = vmatprep.mubr.f32.mxu0 0.0
        %1776 = vmatmul.mubr.f32.gmra.mrb[0].mxu0 %v1704
        %v1777 = vpop.f32.mrb[0].mxu0
        %v1778 = vadd.f32 0.0, %v1777
        %v1779 = vpop.f32.mrb[0].mxu0
        %1780 = vdwg.mxu0
        %v1781 = vadd.f32 %v1539, %v1773
        %v1782 = vadd.f32 %v1540, %v1778
        %s1783 = scalar_lea.vmem %s2, 64
        %v1784 = vld [vmem:[%s1783] sm:$0xff]
        %v1785 = vld [vmem:[%s1783 + $0x8] sm:$0xff]
        %s1786 = scalar_lea.vmem %s2, 176
        %v1787 = vld [vmem:[%s1786] sm:$0xff]
        %v1788 = vld [vmem:[%s1786 + $0x8] sm:$0xff]
        %1789 = vmatprep.subr.mxu0 0.0
        %1790 = vmatpush1.msra.mxu0 %v1787
        %1791 = vmatprep.subr.mxu0 0.0
        %1792 = vmatpush1.msra.mxu0 %v1788
        %1793 = vmatprep.subr.mxu0 0.0
        %1794 = vmatpush1.msra.mxu0 0.0
        %1795 = vmatprep.subr.mxu0 0.0
        %1796 = vmatpush1.msra.mxu0 0.0
        %1797 = vmatprep.subr.mxu0 0.0
        %1798 = vmatpush1.msra.mxu0 0.0
        %1799 = vmatprep.subr.mxu0 0.0
        %1800 = vmatpush1.msra.mxu0 0.0
        %1801 = vmatprep.subr.mxu0 0.0
        %1802 = vmatpush1.msra.mxu0 0.0
        %1803 = vmatprep.subr.mxu0 0.0
        %1804 = vmatpush1.msra.mxu0 0.0
        %1805 = vmatprep.subr.mxu0 0.0
        %1806 = vmatpush1.msra.mxu0 0.0
        %1807 = vmatprep.subr.mxu0 0.0
        %1808 = vmatpush1.msra.mxu0 0.0
        %1809 = vmatprep.subr.mxu0 0.0
        %1810 = vmatpush1.msra.mxu0 0.0
        %1811 = vmatprep.subr.mxu0 0.0
        %1812 = vmatpush1.msra.mxu0 0.0
        %1813 = vmatprep.subr.mxu0 0.0
        %1814 = vmatpush1.msra.mxu0 0.0
        %1815 = vmatprep.subr.mxu0 0.0
        %1816 = vmatpush1.msra.mxu0 0.0
        %1817 = vmatprep.subr.mxu0 0.0
        %1818 = vmatpush1.msra.mxu0 0.0
        %1819 = vmatprep.subr.mxu0 0.0
        %1820 = vmatpush1.msra.mxu0 0.0
        %1821 = vmatprep.subr.mxu0 0.0
        %1822 = vmatpush1.msra.mxu0 0.0
        %1823 = vmatprep.subr.mxu0 0.0
        %1824 = vmatpush1.msra.mxu0 0.0
        %1825 = vmatprep.subr.mxu0 0.0
        %1826 = vmatpush1.msra.mxu0 0.0
        %1827 = vmatprep.subr.mxu0 0.0
        %1828 = vmatpush1.msra.mxu0 0.0
        %1829 = vmatprep.subr.mxu0 0.0
        %1830 = vmatpush1.msra.mxu0 0.0
        %1831 = vmatprep.subr.mxu0 0.0
        %1832 = vmatpush1.msra.mxu0 0.0
        %1833 = vmatprep.subr.mxu0 0.0
        %1834 = vmatpush1.msra.mxu0 0.0
        %1835 = vmatprep.subr.mxu0 0.0
        %1836 = vmatpush1.msra.mxu0 0.0
        %1837 = vmatprep.subr.mxu0 0.0
        %1838 = vmatpush1.msra.mxu0 0.0
        %1839 = vmatprep.subr.mxu0 0.0
        %1840 = vmatpush1.msra.mxu0 0.0
        %1841 = vmatprep.subr.mxu0 0.0
        %1842 = vmatpush1.msra.mxu0 0.0
        %1843 = vmatprep.subr.mxu0 0.0
        %1844 = vmatpush1.msra.mxu0 0.0
        %1845 = vmatprep.subr.mxu0 0.0
        %1846 = vmatpush1.msra.mxu0 0.0
        %1847 = vmatprep.subr.mxu0 0.0
        %1848 = vmatpush1.msra.mxu0 0.0
        %1849 = vmatprep.subr.mxu0 0.0
        %1850 = vmatpush1.msra.mxu0 0.0
        %1851 = vmatprep.subr.mxu0 0.0
        %1852 = vmatpush1.msra.mxu0 0.0
        %1853 = vmatprep.mubr.f32.mxu0 0.0
        %1854 = vmatmul.mubr.f32.gmra.mrb[0].mxu0 %v815
        %v1855 = vpop.f32.mrb[0].mxu0
        %v1856 = vadd.f32 0.0, %v1855
        %v1857 = vpop.f32.mrb[0].mxu0
        %1858 = vmatprep.mubr.f32.mxu0 0.0
        %1859 = vmatmul.mubr.f32.gmra.mrb[0].mxu0 %v818
        %v1860 = vpop.f32.mrb[0].mxu0
        %v1861 = vadd.f32 0.0, %v1860
        %v1862 = vpop.f32.mrb[0].mxu0
        %1863 = vdwg.mxu0
        %1864 = vmatprep.subr.mxu0 0.0
        %1865 = vmatpush1.msra.mxu0 %v1784
        %1866 = vmatprep.subr.mxu0 0.0
        %1867 = vmatpush1.msra.mxu0 %v1785
        %1868 = vmatprep.subr.mxu0 0.0
        %1869 = vmatpush1.msra.mxu0 0.0
        %1870 = vmatprep.subr.mxu0 0.0
        %1871 = vmatpush1.msra.mxu0 0.0
        %1872 = vmatprep.subr.mxu0 0.0
        %1873 = vmatpush1.msra.mxu0 0.0
        %1874 = vmatprep.subr.mxu0 0.0
        %1875 = vmatpush1.msra.mxu0 0.0
        %1876 = vmatprep.subr.mxu0 0.0
        %1877 = vmatpush1.msra.mxu0 0.0
        %1878 = vmatprep.subr.mxu0 0.0
        %1879 = vmatpush1.msra.mxu0 0.0
        %1880 = vmatprep.subr.mxu0 0.0
        %1881 = vmatpush1.msra.mxu0 0.0
        %1882 = vmatprep.subr.mxu0 0.0
        %1883 = vmatpush1.msra.mxu0 0.0
        %1884 = vmatprep.subr.mxu0 0.0
        %1885 = vmatpush1.msra.mxu0 0.0
        %1886 = vmatprep.subr.mxu0 0.0
        %1887 = vmatpush1.msra.mxu0 0.0
        %1888 = vmatprep.subr.mxu0 0.0
        %1889 = vmatpush1.msra.mxu0 0.0
        %1890 = vmatprep.subr.mxu0 0.0
        %1891 = vmatpush1.msra.mxu0 0.0
        %1892 = vmatprep.subr.mxu0 0.0
        %1893 = vmatpush1.msra.mxu0 0.0
        %1894 = vmatprep.subr.mxu0 0.0
        %1895 = vmatpush1.msra.mxu0 0.0
        %1896 = vmatprep.subr.mxu0 0.0
        %1897 = vmatpush1.msra.mxu0 0.0
        %1898 = vmatprep.subr.mxu0 0.0
        %1899 = vmatpush1.msra.mxu0 0.0
        %1900 = vmatprep.subr.mxu0 0.0
        %1901 = vmatpush1.msra.mxu0 0.0
        %1902 = vmatprep.subr.mxu0 0.0
        %1903 = vmatpush1.msra.mxu0 0.0
        %1904 = vmatprep.subr.mxu0 0.0
        %1905 = vmatpush1.msra.mxu0 0.0
        %1906 = vmatprep.subr.mxu0 0.0
        %1907 = vmatpush1.msra.mxu0 0.0
        %1908 = vmatprep.subr.mxu0 0.0
        %1909 = vmatpush1.msra.mxu0 0.0
        %1910 = vmatprep.subr.mxu0 0.0
        %1911 = vmatpush1.msra.mxu0 0.0
        %1912 = vmatprep.subr.mxu0 0.0
        %1913 = vmatpush1.msra.mxu0 0.0
        %1914 = vmatprep.subr.mxu0 0.0
        %1915 = vmatpush1.msra.mxu0 0.0
        %1916 = vmatprep.subr.mxu0 0.0
        %1917 = vmatpush1.msra.mxu0 0.0
        %1918 = vmatprep.subr.mxu0 0.0
        %1919 = vmatpush1.msra.mxu0 0.0
        %1920 = vmatprep.subr.mxu0 0.0
        %1921 = vmatpush1.msra.mxu0 0.0
        %1922 = vmatprep.subr.mxu0 0.0
        %1923 = vmatpush1.msra.mxu0 0.0
        %1924 = vmatprep.subr.mxu0 0.0
        %1925 = vmatpush1.msra.mxu0 0.0
        %1926 = vmatprep.subr.mxu0 0.0
        %1927 = vmatpush1.msra.mxu0 0.0
        %1928 = vmatprep.mubr.f32.mxu0 0.0
        %1929 = vmatmul.mubr.f32.gmra.mrb[0].mxu0 %v896
        %v1930 = vpop.f32.mrb[0].mxu0
        %v1931 = vadd.f32 %v1856, %v1930
        %v1932 = vpop.f32.mrb[0].mxu0
        %1933 = vmatprep.mubr.f32.mxu0 0.0
        %1934 = vmatmul.mubr.f32.gmra.mrb[0].mxu0 %v899
        %v1935 = vpop.f32.mrb[0].mxu0
        %v1936 = vadd.f32 %v1861, %v1935
        %v1937 = vpop.f32.mrb[0].mxu0
        %1938 = vdwg.mxu0
        %s1939 = scalar_lea.vmem %s1, 64
        %v1940 = vld [vmem:[%s1939] sm:$0xff]
        %v1941 = vld [vmem:[%s1939 + $0x8] sm:$0xff]
        %v1943 = vsel %vm297, %v1940, 0
        %v1946 = vsel %vm297, %v1941, 0
        %1948 = vmatprep.subr.mxu0 0.0
        %1949 = vmatpush1.msra.mxu0 %v1931
        %1950 = vmatprep.subr.mxu0 0.0
        %1951 = vmatpush1.msra.mxu0 %v1936
        %1952 = vmatprep.subr.mxu0 0.0
        %1953 = vmatpush1.msra.mxu0 0.0
        %1954 = vmatprep.subr.mxu0 0.0
        %1955 = vmatpush1.msra.mxu0 0.0
        %1956 = vmatprep.subr.mxu0 0.0
        %1957 = vmatpush1.msra.mxu0 0.0
        %1958 = vmatprep.subr.mxu0 0.0
        %1959 = vmatpush1.msra.mxu0 0.0
        %1960 = vmatprep.subr.mxu0 0.0
        %1961 = vmatpush1.msra.mxu0 0.0
        %1962 = vmatprep.subr.mxu0 0.0
        %1963 = vmatpush1.msra.mxu0 0.0
        %1964 = vmatprep.subr.mxu0 0.0
        %1965 = vmatpush1.msra.mxu0 0.0
        %1966 = vmatprep.subr.mxu0 0.0
        %1967 = vmatpush1.msra.mxu0 0.0
        %1968 = vmatprep.subr.mxu0 0.0
        %1969 = vmatpush1.msra.mxu0 0.0
        %1970 = vmatprep.subr.mxu0 0.0
        %1971 = vmatpush1.msra.mxu0 0.0
        %1972 = vmatprep.subr.mxu0 0.0
        %1973 = vmatpush1.msra.mxu0 0.0
        %1974 = vmatprep.subr.mxu0 0.0
        %1975 = vmatpush1.msra.mxu0 0.0
        %1976 = vmatprep.subr.mxu0 0.0
        %1977 = vmatpush1.msra.mxu0 0.0
        %1978 = vmatprep.subr.mxu0 0.0
        %1979 = vmatpush1.msra.mxu0 0.0
        %1980 = vmatprep.subr.mxu0 0.0
        %1981 = vmatpush1.msra.mxu0 0.0
        %1982 = vmatprep.subr.mxu0 0.0
        %1983 = vmatpush1.msra.mxu0 0.0
        %1984 = vmatprep.subr.mxu0 0.0
        %1985 = vmatpush1.msra.mxu0 0.0
        %1986 = vmatprep.subr.mxu0 0.0
        %1987 = vmatpush1.msra.mxu0 0.0
        %1988 = vmatprep.subr.mxu0 0.0
        %1989 = vmatpush1.msra.mxu0 0.0
        %1990 = vmatprep.subr.mxu0 0.0
        %1991 = vmatpush1.msra.mxu0 0.0
        %1992 = vmatprep.subr.mxu0 0.0
        %1993 = vmatpush1.msra.mxu0 0.0
        %1994 = vmatprep.subr.mxu0 0.0
        %1995 = vmatpush1.msra.mxu0 0.0
        %1996 = vmatprep.subr.mxu0 0.0
        %1997 = vmatpush1.msra.mxu0 0.0
        %1998 = vmatprep.subr.mxu0 0.0
        %1999 = vmatpush1.msra.mxu0 0.0
        %2000 = vmatprep.subr.mxu0 0.0
        %2001 = vmatpush1.msra.mxu0 0.0
        %2002 = vmatprep.subr.mxu0 0.0
        %2003 = vmatpush1.msra.mxu0 0.0
        %2004 = vmatprep.subr.mxu0 0.0
        %2005 = vmatpush1.msra.mxu0 0.0
        %2006 = vmatprep.subr.mxu0 0.0
        %2007 = vmatpush1.msra.mxu0 0.0
        %2008 = vmatprep.subr.mxu0 0.0
        %2009 = vmatpush1.msra.mxu0 0.0
        %2010 = vmatprep.subr.mxu0 0.0
        %2011 = vmatpush1.msra.mxu0 0.0
        %2012 = vmatprep.mubr.f32.mxu0 0.0
        %2013 = vmatmul.mubr.f32.gmra.mrb[0].mxu0 %v1943
        %v2014 = vpop.f32.mrb[0].mxu0
        %v2015 = vadd.f32 0.0, %v2014
        %v2016 = vpop.f32.mrb[0].mxu0
        %2017 = vmatprep.mubr.f32.mxu0 0.0
        %2018 = vmatmul.mubr.f32.gmra.mrb[0].mxu0 %v1946
        %v2019 = vpop.f32.mrb[0].mxu0
        %v2020 = vadd.f32 0.0, %v2019
        %v2021 = vpop.f32.mrb[0].mxu0
        %2022 = vdwg.mxu0
        %v2023 = vadd.f32 %v1781, %v2015
        %v2024 = vadd.f32 %v1782, %v2020
        %s2025 = scalar_lea.vmem %s2, 80
        %v2026 = vld [vmem:[%s2025] sm:$0xff]
        %v2027 = vld [vmem:[%s2025 + $0x8] sm:$0xff]
        %s2028 = scalar_lea.vmem %s2, 192
        %v2029 = vld [vmem:[%s2028] sm:$0xff]
        %v2030 = vld [vmem:[%s2028 + $0x8] sm:$0xff]
        %2031 = vmatprep.subr.mxu0 0.0
        %2032 = vmatpush1.msra.mxu0 %v2029
        %2033 = vmatprep.subr.mxu0 0.0
        %2034 = vmatpush1.msra.mxu0 %v2030
        %2035 = vmatprep.subr.mxu0 0.0
        %2036 = vmatpush1.msra.mxu0 0.0
        %2037 = vmatprep.subr.mxu0 0.0
        %2038 = vmatpush1.msra.mxu0 0.0
        %2039 = vmatprep.subr.mxu0 0.0
        %2040 = vmatpush1.msra.mxu0 0.0
        %2041 = vmatprep.subr.mxu0 0.0
        %2042 = vmatpush1.msra.mxu0 0.0
        %2043 = vmatprep.subr.mxu0 0.0
        %2044 = vmatpush1.msra.mxu0 0.0
        %2045 = vmatprep.subr.mxu0 0.0
        %2046 = vmatpush1.msra.mxu0 0.0
        %2047 = vmatprep.subr.mxu0 0.0
        %2048 = vmatpush1.msra.mxu0 0.0
        %2049 = vmatprep.subr.mxu0 0.0
        %2050 = vmatpush1.msra.mxu0 0.0
        %2051 = vmatprep.subr.mxu0 0.0
        %2052 = vmatpush1.msra.mxu0 0.0
        %2053 = vmatprep.subr.mxu0 0.0
        %2054 = vmatpush1.msra.mxu0 0.0
        %2055 = vmatprep.subr.mxu0 0.0
        %2056 = vmatpush1.msra.mxu0 0.0
        %2057 = vmatprep.subr.mxu0 0.0
        %2058 = vmatpush1.msra.mxu0 0.0
        %2059 = vmatprep.subr.mxu0 0.0
        %2060 = vmatpush1.msra.mxu0 0.0
        %2061 = vmatprep.subr.mxu0 0.0
        %2062 = vmatpush1.msra.mxu0 0.0
        %2063 = vmatprep.subr.mxu0 0.0
        %2064 = vmatpush1.msra.mxu0 0.0
        %2065 = vmatprep.subr.mxu0 0.0
        %2066 = vmatpush1.msra.mxu0 0.0
        %2067 = vmatprep.subr.mxu0 0.0
        %2068 = vmatpush1.msra.mxu0 0.0
        %2069 = vmatprep.subr.mxu0 0.0
        %2070 = vmatpush1.msra.mxu0 0.0
        %2071 = vmatprep.subr.mxu0 0.0
        %2072 = vmatpush1.msra.mxu0 0.0
        %2073 = vmatprep.subr.mxu0 0.0
        %2074 = vmatpush1.msra.mxu0 0.0
        %2075 = vmatprep.subr.mxu0 0.0
        %2076 = vmatpush1.msra.mxu0 0.0
        %2077 = vmatprep.subr.mxu0 0.0
        %2078 = vmatpush1.msra.mxu0 0.0
        %2079 = vmatprep.subr.mxu0 0.0
        %2080 = vmatpush1.msra.mxu0 0.0
        %2081 = vmatprep.subr.mxu0 0.0
        %2082 = vmatpush1.msra.mxu0 0.0
        %2083 = vmatprep.subr.mxu0 0.0
        %2084 = vmatpush1.msra.mxu0 0.0
        %2085 = vmatprep.subr.mxu0 0.0
        %2086 = vmatpush1.msra.mxu0 0.0
        %2087 = vmatprep.subr.mxu0 0.0
        %2088 = vmatpush1.msra.mxu0 0.0
        %2089 = vmatprep.subr.mxu0 0.0
        %2090 = vmatpush1.msra.mxu0 0.0
        %2091 = vmatprep.subr.mxu0 0.0
        %2092 = vmatpush1.msra.mxu0 0.0
        %2093 = vmatprep.subr.mxu0 0.0
        %2094 = vmatpush1.msra.mxu0 0.0
        %2095 = vmatprep.mubr.f32.mxu0 0.0
        %2096 = vmatmul.mubr.f32.gmra.mrb[0].mxu0 %v815
        %v2097 = vpop.f32.mrb[0].mxu0
        %v2098 = vadd.f32 0.0, %v2097
        %v2099 = vpop.f32.mrb[0].mxu0
        %2100 = vmatprep.mubr.f32.mxu0 0.0
        %2101 = vmatmul.mubr.f32.gmra.mrb[0].mxu0 %v818
        %v2102 = vpop.f32.mrb[0].mxu0
        %v2103 = vadd.f32 0.0, %v2102
        %v2104 = vpop.f32.mrb[0].mxu0
        %2105 = vdwg.mxu0
        %2106 = vmatprep.subr.mxu0 0.0
        %2107 = vmatpush1.msra.mxu0 %v2026
        %2108 = vmatprep.subr.mxu0 0.0
        %2109 = vmatpush1.msra.mxu0 %v2027
        %2110 = vmatprep.subr.mxu0 0.0
        %2111 = vmatpush1.msra.mxu0 0.0
        %2112 = vmatprep.subr.mxu0 0.0
        %2113 = vmatpush1.msra.mxu0 0.0
        %2114 = vmatprep.subr.mxu0 0.0
        %2115 = vmatpush1.msra.mxu0 0.0
        %2116 = vmatprep.subr.mxu0 0.0
        %2117 = vmatpush1.msra.mxu0 0.0
        %2118 = vmatprep.subr.mxu0 0.0
        %2119 = vmatpush1.msra.mxu0 0.0
        %2120 = vmatprep.subr.mxu0 0.0
        %2121 = vmatpush1.msra.mxu0 0.0
        %2122 = vmatprep.subr.mxu0 0.0
        %2123 = vmatpush1.msra.mxu0 0.0
        %2124 = vmatprep.subr.mxu0 0.0
        %2125 = vmatpush1.msra.mxu0 0.0
        %2126 = vmatprep.subr.mxu0 0.0
        %2127 = vmatpush1.msra.mxu0 0.0
        %2128 = vmatprep.subr.mxu0 0.0
        %2129 = vmatpush1.msra.mxu0 0.0
        %2130 = vmatprep.subr.mxu0 0.0
        %2131 = vmatpush1.msra.mxu0 0.0
        %2132 = vmatprep.subr.mxu0 0.0
        %2133 = vmatpush1.msra.mxu0 0.0
        %2134 = vmatprep.subr.mxu0 0.0
        %2135 = vmatpush1.msra.mxu0 0.0
        %2136 = vmatprep.subr.mxu0 0.0
        %2137 = vmatpush1.msra.mxu0 0.0
        %2138 = vmatprep.subr.mxu0 0.0
        %2139 = vmatpush1.msra.mxu0 0.0
        %2140 = vmatprep.subr.mxu0 0.0
        %2141 = vmatpush1.msra.mxu0 0.0
        %2142 = vmatprep.subr.mxu0 0.0
        %2143 = vmatpush1.msra.mxu0 0.0
        %2144 = vmatprep.subr.mxu0 0.0
        %2145 = vmatpush1.msra.mxu0 0.0
        %2146 = vmatprep.subr.mxu0 0.0
        %2147 = vmatpush1.msra.mxu0 0.0
        %2148 = vmatprep.subr.mxu0 0.0
        %2149 = vmatpush1.msra.mxu0 0.0
        %2150 = vmatprep.subr.mxu0 0.0
        %2151 = vmatpush1.msra.mxu0 0.0
        %2152 = vmatprep.subr.mxu0 0.0
        %2153 = vmatpush1.msra.mxu0 0.0
        %2154 = vmatprep.subr.mxu0 0.0
        %2155 = vmatpush1.msra.mxu0 0.0
        %2156 = vmatprep.subr.mxu0 0.0
        %2157 = vmatpush1.msra.mxu0 0.0
        %2158 = vmatprep.subr.mxu0 0.0
        %2159 = vmatpush1.msra.mxu0 0.0
        %2160 = vmatprep.subr.mxu0 0.0
        %2161 = vmatpush1.msra.mxu0 0.0
        %2162 = vmatprep.subr.mxu0 0.0
        %2163 = vmatpush1.msra.mxu0 0.0
        %2164 = vmatprep.subr.mxu0 0.0
        %2165 = vmatpush1.msra.mxu0 0.0
        %2166 = vmatprep.subr.mxu0 0.0
        %2167 = vmatpush1.msra.mxu0 0.0
        %2168 = vmatprep.subr.mxu0 0.0
        %2169 = vmatpush1.msra.mxu0 0.0
        %2170 = vmatprep.mubr.f32.mxu0 0.0
        %2171 = vmatmul.mubr.f32.gmra.mrb[0].mxu0 %v896
        %v2172 = vpop.f32.mrb[0].mxu0
        %v2173 = vadd.f32 %v2098, %v2172
        %v2174 = vpop.f32.mrb[0].mxu0
        %2175 = vmatprep.mubr.f32.mxu0 0.0
        %2176 = vmatmul.mubr.f32.gmra.mrb[0].mxu0 %v899
        %v2177 = vpop.f32.mrb[0].mxu0
        %v2178 = vadd.f32 %v2103, %v2177
        %v2179 = vpop.f32.mrb[0].mxu0
        %2180 = vdwg.mxu0
        %s2181 = scalar_lea.vmem %s1, 80
        %v2182 = vld [vmem:[%s2181] sm:$0xff]
        %v2183 = vld [vmem:[%s2181 + $0x8] sm:$0xff]
        %v2185 = vsel %vm297, %v2182, 0
        %v2188 = vsel %vm297, %v2183, 0
        %2190 = vmatprep.subr.mxu0 0.0
        %2191 = vmatpush1.msra.mxu0 %v2173
        %2192 = vmatprep.subr.mxu0 0.0
        %2193 = vmatpush1.msra.mxu0 %v2178
        %2194 = vmatprep.subr.mxu0 0.0
        %2195 = vmatpush1.msra.mxu0 0.0
        %2196 = vmatprep.subr.mxu0 0.0
        %2197 = vmatpush1.msra.mxu0 0.0
        %2198 = vmatprep.subr.mxu0 0.0
        %2199 = vmatpush1.msra.mxu0 0.0
        %2200 = vmatprep.subr.mxu0 0.0
        %2201 = vmatpush1.msra.mxu0 0.0
        %2202 = vmatprep.subr.mxu0 0.0
        %2203 = vmatpush1.msra.mxu0 0.0
        %2204 = vmatprep.subr.mxu0 0.0
        %2205 = vmatpush1.msra.mxu0 0.0
        %2206 = vmatprep.subr.mxu0 0.0
        %2207 = vmatpush1.msra.mxu0 0.0
        %2208 = vmatprep.subr.mxu0 0.0
        %2209 = vmatpush1.msra.mxu0 0.0
        %2210 = vmatprep.subr.mxu0 0.0
        %2211 = vmatpush1.msra.mxu0 0.0
        %2212 = vmatprep.subr.mxu0 0.0
        %2213 = vmatpush1.msra.mxu0 0.0
        %2214 = vmatprep.subr.mxu0 0.0
        %2215 = vmatpush1.msra.mxu0 0.0
        %2216 = vmatprep.subr.mxu0 0.0
        %2217 = vmatpush1.msra.mxu0 0.0
        %2218 = vmatprep.subr.mxu0 0.0
        %2219 = vmatpush1.msra.mxu0 0.0
        %2220 = vmatprep.subr.mxu0 0.0
        %2221 = vmatpush1.msra.mxu0 0.0
        %2222 = vmatprep.subr.mxu0 0.0
        %2223 = vmatpush1.msra.mxu0 0.0
        %2224 = vmatprep.subr.mxu0 0.0
        %2225 = vmatpush1.msra.mxu0 0.0
        %2226 = vmatprep.subr.mxu0 0.0
        %2227 = vmatpush1.msra.mxu0 0.0
        %2228 = vmatprep.subr.mxu0 0.0
        %2229 = vmatpush1.msra.mxu0 0.0
        %2230 = vmatprep.subr.mxu0 0.0
        %2231 = vmatpush1.msra.mxu0 0.0
        %2232 = vmatprep.subr.mxu0 0.0
        %2233 = vmatpush1.msra.mxu0 0.0
        %2234 = vmatprep.subr.mxu0 0.0
        %2235 = vmatpush1.msra.mxu0 0.0
        %2236 = vmatprep.subr.mxu0 0.0
        %2237 = vmatpush1.msra.mxu0 0.0
        %2238 = vmatprep.subr.mxu0 0.0
        %2239 = vmatpush1.msra.mxu0 0.0
        %2240 = vmatprep.subr.mxu0 0.0
        %2241 = vmatpush1.msra.mxu0 0.0
        %2242 = vmatprep.subr.mxu0 0.0
        %2243 = vmatpush1.msra.mxu0 0.0
        %2244 = vmatprep.subr.mxu0 0.0
        %2245 = vmatpush1.msra.mxu0 0.0
        %2246 = vmatprep.subr.mxu0 0.0
        %2247 = vmatpush1.msra.mxu0 0.0
        %2248 = vmatprep.subr.mxu0 0.0
        %2249 = vmatpush1.msra.mxu0 0.0
        %2250 = vmatprep.subr.mxu0 0.0
        %2251 = vmatpush1.msra.mxu0 0.0
        %2252 = vmatprep.subr.mxu0 0.0
        %2253 = vmatpush1.msra.mxu0 0.0
        %2254 = vmatprep.mubr.f32.mxu0 0.0
        %2255 = vmatmul.mubr.f32.gmra.mrb[0].mxu0 %v2185
        %v2256 = vpop.f32.mrb[0].mxu0
        %v2257 = vadd.f32 0.0, %v2256
        %v2258 = vpop.f32.mrb[0].mxu0
        %2259 = vmatprep.mubr.f32.mxu0 0.0
        %2260 = vmatmul.mubr.f32.gmra.mrb[0].mxu0 %v2188
        %v2261 = vpop.f32.mrb[0].mxu0
        %v2262 = vadd.f32 0.0, %v2261
        %v2263 = vpop.f32.mrb[0].mxu0
        %2264 = vdwg.mxu0
        %v2265 = vadd.f32 %v2023, %v2257
        %v2266 = vadd.f32 %v2024, %v2262
        %s2267 = scalar_lea.vmem %s2, 96
        %v2268 = vld [vmem:[%s2267] sm:$0xff]
        %v2269 = vld [vmem:[%s2267 + $0x8] sm:$0xff]
        %s2270 = scalar_lea.vmem %s2, 208
        %v2271 = vld [vmem:[%s2270] sm:$0xff]
        %v2272 = vld [vmem:[%s2270 + $0x8] sm:$0xff]
        %2273 = vmatprep.subr.mxu0 0.0
        %2274 = vmatpush1.msra.mxu0 %v2271
        %2275 = vmatprep.subr.mxu0 0.0
        %2276 = vmatpush1.msra.mxu0 %v2272
        %2277 = vmatprep.subr.mxu0 0.0
        %2278 = vmatpush1.msra.mxu0 0.0
        %2279 = vmatprep.subr.mxu0 0.0
        %2280 = vmatpush1.msra.mxu0 0.0
        %2281 = vmatprep.subr.mxu0 0.0
        %2282 = vmatpush1.msra.mxu0 0.0
        %2283 = vmatprep.subr.mxu0 0.0
        %2284 = vmatpush1.msra.mxu0 0.0
        %2285 = vmatprep.subr.mxu0 0.0
        %2286 = vmatpush1.msra.mxu0 0.0
        %2287 = vmatprep.subr.mxu0 0.0
        %2288 = vmatpush1.msra.mxu0 0.0
        %2289 = vmatprep.subr.mxu0 0.0
        %2290 = vmatpush1.msra.mxu0 0.0
        %2291 = vmatprep.subr.mxu0 0.0
        %2292 = vmatpush1.msra.mxu0 0.0
        %2293 = vmatprep.subr.mxu0 0.0
        %2294 = vmatpush1.msra.mxu0 0.0
        %2295 = vmatprep.subr.mxu0 0.0
        %2296 = vmatpush1.msra.mxu0 0.0
        %2297 = vmatprep.subr.mxu0 0.0
        %2298 = vmatpush1.msra.mxu0 0.0
        %2299 = vmatprep.subr.mxu0 0.0
        %2300 = vmatpush1.msra.mxu0 0.0
        %2301 = vmatprep.subr.mxu0 0.0
        %2302 = vmatpush1.msra.mxu0 0.0
        %2303 = vmatprep.subr.mxu0 0.0
        %2304 = vmatpush1.msra.mxu0 0.0
        %2305 = vmatprep.subr.mxu0 0.0
        %2306 = vmatpush1.msra.mxu0 0.0
        %2307 = vmatprep.subr.mxu0 0.0
        %2308 = vmatpush1.msra.mxu0 0.0
        %2309 = vmatprep.subr.mxu0 0.0
        %2310 = vmatpush1.msra.mxu0 0.0
        %2311 = vmatprep.subr.mxu0 0.0
        %2312 = vmatpush1.msra.mxu0 0.0
        %2313 = vmatprep.subr.mxu0 0.0
        %2314 = vmatpush1.msra.mxu0 0.0
        %2315 = vmatprep.subr.mxu0 0.0
        %2316 = vmatpush1.msra.mxu0 0.0
        %2317 = vmatprep.subr.mxu0 0.0
        %2318 = vmatpush1.msra.mxu0 0.0
        %2319 = vmatprep.subr.mxu0 0.0
        %2320 = vmatpush1.msra.mxu0 0.0
        %2321 = vmatprep.subr.mxu0 0.0
        %2322 = vmatpush1.msra.mxu0 0.0
        %2323 = vmatprep.subr.mxu0 0.0
        %2324 = vmatpush1.msra.mxu0 0.0
        %2325 = vmatprep.subr.mxu0 0.0
        %2326 = vmatpush1.msra.mxu0 0.0
        %2327 = vmatprep.subr.mxu0 0.0
        %2328 = vmatpush1.msra.mxu0 0.0
        %2329 = vmatprep.subr.mxu0 0.0
        %2330 = vmatpush1.msra.mxu0 0.0
        %2331 = vmatprep.subr.mxu0 0.0
        %2332 = vmatpush1.msra.mxu0 0.0
        %2333 = vmatprep.subr.mxu0 0.0
        %2334 = vmatpush1.msra.mxu0 0.0
        %2335 = vmatprep.subr.mxu0 0.0
        %2336 = vmatpush1.msra.mxu0 0.0
        %2337 = vmatprep.mubr.f32.mxu0 0.0
        %2338 = vmatmul.mubr.f32.gmra.mrb[0].mxu0 %v815
        %v2339 = vpop.f32.mrb[0].mxu0
        %v2340 = vadd.f32 0.0, %v2339
        %v2341 = vpop.f32.mrb[0].mxu0
        %2342 = vmatprep.mubr.f32.mxu0 0.0
        %2343 = vmatmul.mubr.f32.gmra.mrb[0].mxu0 %v818
        %v2344 = vpop.f32.mrb[0].mxu0
        %v2345 = vadd.f32 0.0, %v2344
        %v2346 = vpop.f32.mrb[0].mxu0
        %2347 = vdwg.mxu0
        %2348 = vmatprep.subr.mxu0 0.0
        %2349 = vmatpush1.msra.mxu0 %v2268
        %2350 = vmatprep.subr.mxu0 0.0
        %2351 = vmatpush1.msra.mxu0 %v2269
        %2352 = vmatprep.subr.mxu0 0.0
        %2353 = vmatpush1.msra.mxu0 0.0
        %2354 = vmatprep.subr.mxu0 0.0
        %2355 = vmatpush1.msra.mxu0 0.0
        %2356 = vmatprep.subr.mxu0 0.0
        %2357 = vmatpush1.msra.mxu0 0.0
        %2358 = vmatprep.subr.mxu0 0.0
        %2359 = vmatpush1.msra.mxu0 0.0
        %2360 = vmatprep.subr.mxu0 0.0
        %2361 = vmatpush1.msra.mxu0 0.0
        %2362 = vmatprep.subr.mxu0 0.0
        %2363 = vmatpush1.msra.mxu0 0.0
        %2364 = vmatprep.subr.mxu0 0.0
        %2365 = vmatpush1.msra.mxu0 0.0
        %2366 = vmatprep.subr.mxu0 0.0
        %2367 = vmatpush1.msra.mxu0 0.0
        %2368 = vmatprep.subr.mxu0 0.0
        %2369 = vmatpush1.msra.mxu0 0.0
        %2370 = vmatprep.subr.mxu0 0.0
        %2371 = vmatpush1.msra.mxu0 0.0
        %2372 = vmatprep.subr.mxu0 0.0
        %2373 = vmatpush1.msra.mxu0 0.0
        %2374 = vmatprep.subr.mxu0 0.0
        %2375 = vmatpush1.msra.mxu0 0.0
        %2376 = vmatprep.subr.mxu0 0.0
        %2377 = vmatpush1.msra.mxu0 0.0
        %2378 = vmatprep.subr.mxu0 0.0
        %2379 = vmatpush1.msra.mxu0 0.0
        %2380 = vmatprep.subr.mxu0 0.0
        %2381 = vmatpush1.msra.mxu0 0.0
        %2382 = vmatprep.subr.mxu0 0.0
        %2383 = vmatpush1.msra.mxu0 0.0
        %2384 = vmatprep.subr.mxu0 0.0
        %2385 = vmatpush1.msra.mxu0 0.0
        %2386 = vmatprep.subr.mxu0 0.0
        %2387 = vmatpush1.msra.mxu0 0.0
        %2388 = vmatprep.subr.mxu0 0.0
        %2389 = vmatpush1.msra.mxu0 0.0
        %2390 = vmatprep.subr.mxu0 0.0
        %2391 = vmatpush1.msra.mxu0 0.0
        %2392 = vmatprep.subr.mxu0 0.0
        %2393 = vmatpush1.msra.mxu0 0.0
        %2394 = vmatprep.subr.mxu0 0.0
        %2395 = vmatpush1.msra.mxu0 0.0
        %2396 = vmatprep.subr.mxu0 0.0
        %2397 = vmatpush1.msra.mxu0 0.0
        %2398 = vmatprep.subr.mxu0 0.0
        %2399 = vmatpush1.msra.mxu0 0.0
        %2400 = vmatprep.subr.mxu0 0.0
        %2401 = vmatpush1.msra.mxu0 0.0
        %2402 = vmatprep.subr.mxu0 0.0
        %2403 = vmatpush1.msra.mxu0 0.0
        %2404 = vmatprep.subr.mxu0 0.0
        %2405 = vmatpush1.msra.mxu0 0.0
        %2406 = vmatprep.subr.mxu0 0.0
        %2407 = vmatpush1.msra.mxu0 0.0
        %2408 = vmatprep.subr.mxu0 0.0
        %2409 = vmatpush1.msra.mxu0 0.0
        %2410 = vmatprep.subr.mxu0 0.0
        %2411 = vmatpush1.msra.mxu0 0.0
        %2412 = vmatprep.mubr.f32.mxu0 0.0
        %2413 = vmatmul.mubr.f32.gmra.mrb[0].mxu0 %v896
        %v2414 = vpop.f32.mrb[0].mxu0
        %v2415 = vadd.f32 %v2340, %v2414
        %v2416 = vpop.f32.mrb[0].mxu0
        %2417 = vmatprep.mubr.f32.mxu0 0.0
        %2418 = vmatmul.mubr.f32.gmra.mrb[0].mxu0 %v899
        %v2419 = vpop.f32.mrb[0].mxu0
        %v2420 = vadd.f32 %v2345, %v2419
        %v2421 = vpop.f32.mrb[0].mxu0
        %2422 = vdwg.mxu0
        %s2423 = scalar_lea.vmem %s1, 96
        %v2424 = vld [vmem:[%s2423] sm:$0xff]
        %v2425 = vld [vmem:[%s2423 + $0x8] sm:$0xff]
        %v2427 = vsel %vm297, %v2424, 0
        %v2430 = vsel %vm297, %v2425, 0
        %2432 = vmatprep.subr.mxu0 0.0
        %2433 = vmatpush1.msra.mxu0 %v2415
        %2434 = vmatprep.subr.mxu0 0.0
        %2435 = vmatpush1.msra.mxu0 %v2420
        %2436 = vmatprep.subr.mxu0 0.0
        %2437 = vmatpush1.msra.mxu0 0.0
        %2438 = vmatprep.subr.mxu0 0.0
        %2439 = vmatpush1.msra.mxu0 0.0
        %2440 = vmatprep.subr.mxu0 0.0
        %2441 = vmatpush1.msra.mxu0 0.0
        %2442 = vmatprep.subr.mxu0 0.0
        %2443 = vmatpush1.msra.mxu0 0.0
        %2444 = vmatprep.subr.mxu0 0.0
        %2445 = vmatpush1.msra.mxu0 0.0
        %2446 = vmatprep.subr.mxu0 0.0
        %2447 = vmatpush1.msra.mxu0 0.0
        %2448 = vmatprep.subr.mxu0 0.0
        %2449 = vmatpush1.msra.mxu0 0.0
        %2450 = vmatprep.subr.mxu0 0.0
        %2451 = vmatpush1.msra.mxu0 0.0
        %2452 = vmatprep.subr.mxu0 0.0
        %2453 = vmatpush1.msra.mxu0 0.0
        %2454 = vmatprep.subr.mxu0 0.0
        %2455 = vmatpush1.msra.mxu0 0.0
        %2456 = vmatprep.subr.mxu0 0.0
        %2457 = vmatpush1.msra.mxu0 0.0
        %2458 = vmatprep.subr.mxu0 0.0
        %2459 = vmatpush1.msra.mxu0 0.0
        %2460 = vmatprep.subr.mxu0 0.0
        %2461 = vmatpush1.msra.mxu0 0.0
        %2462 = vmatprep.subr.mxu0 0.0
        %2463 = vmatpush1.msra.mxu0 0.0
        %2464 = vmatprep.subr.mxu0 0.0
        %2465 = vmatpush1.msra.mxu0 0.0
        %2466 = vmatprep.subr.mxu0 0.0
        %2467 = vmatpush1.msra.mxu0 0.0
        %2468 = vmatprep.subr.mxu0 0.0
        %2469 = vmatpush1.msra.mxu0 0.0
        %2470 = vmatprep.subr.mxu0 0.0
        %2471 = vmatpush1.msra.mxu0 0.0
        %2472 = vmatprep.subr.mxu0 0.0
        %2473 = vmatpush1.msra.mxu0 0.0
        %2474 = vmatprep.subr.mxu0 0.0
        %2475 = vmatpush1.msra.mxu0 0.0
        %2476 = vmatprep.subr.mxu0 0.0
        %2477 = vmatpush1.msra.mxu0 0.0
        %2478 = vmatprep.subr.mxu0 0.0
        %2479 = vmatpush1.msra.mxu0 0.0
        %2480 = vmatprep.subr.mxu0 0.0
        %2481 = vmatpush1.msra.mxu0 0.0
        %2482 = vmatprep.subr.mxu0 0.0
        %2483 = vmatpush1.msra.mxu0 0.0
        %2484 = vmatprep.subr.mxu0 0.0
        %2485 = vmatpush1.msra.mxu0 0.0
        %2486 = vmatprep.subr.mxu0 0.0
        %2487 = vmatpush1.msra.mxu0 0.0
        %2488 = vmatprep.subr.mxu0 0.0
        %2489 = vmatpush1.msra.mxu0 0.0
        %2490 = vmatprep.subr.mxu0 0.0
        %2491 = vmatpush1.msra.mxu0 0.0
        %2492 = vmatprep.subr.mxu0 0.0
        %2493 = vmatpush1.msra.mxu0 0.0
        %2494 = vmatprep.subr.mxu0 0.0
        %2495 = vmatpush1.msra.mxu0 0.0
        %2496 = vmatprep.mubr.f32.mxu0 0.0
        %2497 = vmatmul.mubr.f32.gmra.mrb[0].mxu0 %v2427
        %v2498 = vpop.f32.mrb[0].mxu0
        %v2499 = vadd.f32 0.0, %v2498
        %v2500 = vpop.f32.mrb[0].mxu0
        %2501 = vmatprep.mubr.f32.mxu0 0.0
        %2502 = vmatmul.mubr.f32.gmra.mrb[0].mxu0 %v2430
        %v2503 = vpop.f32.mrb[0].mxu0
        %v2504 = vadd.f32 0.0, %v2503
        %v2505 = vpop.f32.mrb[0].mxu0
        %2506 = vdwg.mxu0
        %v2507 = vadd.f32 %v2265, %v2499
        %v2508 = vadd.f32 %v2266, %v2504
        %v2509 = vxor.u32 %v2507, 2147483648
        %v2510 = vxor.u32 %v2508, 2147483648
        %v2511 = vmul.f32 %v2509, 1.442695
        %v2512 = vpow.pop %v2511
        %v2513 = vmul.f32 %v2510, 1.442695
        %v2514 = vpow.pop %v2513
        %v2515 = vadd.f32 %v2512, 1.0
        %v2516 = vadd.f32 %v2514, 1.0
        %v2517 = vrcp.pop %v2515
        %v2518 = vmul.f32 1.0, %v2517
        %v2519 = vrcp.pop %v2516
        %v2520 = vmul.f32 1.0, %v2519
        %2521 = vst.msk [vmem:[%s163] sm:$0xff] %vm297, %v2518
        %2522 = vst.msk [vmem:[%s163 + $0x8] sm:$0xff] %vm297, %v2520
        %s2523 = sand.u32 %s93, 1
        %s2524 = scalar_lea.sflag [#allocation3], %s2523
        %s2525 = sand.u32 %s93, 1
        %s2526 = smul.addr %s2525, 16
        %s2527 = scalar_lea.vmem [#allocation2], %s2526
        // Predicated region
        $region33: #{spatial_attention.1} parent=31 // pred_check
          %p2528 = pneg %p103
        $region34: #{spatial_attention.1} parent=31 // pred_check_branch
          %2530 = sbr.rel (%p2528) target = $region36
        $region35: #{spatial_attention.1} parent=31 // pred_region
          %s2532 = ssub.s32 256, 256
          %2533 = vsyncadd %s2524, %s2532
          %s2534 = smul.addr %s17, 2
          %s2535 = smul.addr %s2534, 128
          %s2536 = scalar_lea.hbm %s3, %s2535
          %s2537 = sshll.u32 %s2527, 4
          %s2538 = int_to_ptr.vmem [resolvable:$true] %s2537
          %2543 = dma.vmem_to_hbm [thread:$0]  %s2538, 256, %s2536, %s2524, 128, 128, 8
        $region36: #{spatial_attention.1} parent=31 // pred_fallthru
          _
      $region32: #{spatial_attention.1} parent=5 // pred_fallthru
        _
      %p2544 = scmp.le.s32.totalorder 2, %s12
      // Predicated region
      $region37: #{spatial_attention.1} parent=5 // pred_check
        %p2545 = pneg %p2544
      $region38: #{spatial_attention.1} parent=5 // pred_check_branch
        %2547 = sbr.rel (%p2545) target = $region40
      $region39: #{spatial_attention.1} parent=5 // pred_region
        %s2548 = ssub.s32 %s12, 2
        // Predicated region
        $region41: #{spatial_attention.1} parent=39 // pred_check
          %p2549 = pneg %p109
        $region42: #{spatial_attention.1} parent=39 // pred_check_branch
          %2551 = sbr.rel (%p2549) target = $region44
        $region43: #{spatial_attention.1} parent=39 // pred_region
          %s2552 = sand.u32 %s94, 1
          %s2553 = scalar_lea.sflag [#allocation3], %s2552
          %s2554 = sand.u32 %s94, 1
          %s2555 = smul.addr %s2554, 16
          %s2556 = scalar_lea.vmem [#allocation2], %s2555
          %2557 = dma.done %s2553, 256
        $region44: #{spatial_attention.1} parent=39 // pred_fallthru
          _
      $region40: #{spatial_attention.1} parent=5 // pred_fallthru
        _
    $region6: #{spatial_attention.1} parent=1 // loop_footer
      %s16 = sadd.s32 1, %s12
    $region7: #{spatial_attention.1} parent=1 // loop_footer_branch
      %11 = sbr.rel target = $region3
    $region8: #{spatial_attention.1} parent=1 // loop_exit
      _
    %2558 = vsyncpa [#allocation3], 1
    %s2559 = scalar_lea.sflag [#allocation3], 1
    %2560 = vsyncpa %s2559, 1

</llo_original>
